<compile_context>
chip_gen: v6e
topology: v6e:2x2x1
jax: 0.10.0
libtpu: 0.0.40
codegen_flags: <defaults>
</compile_context>

<pallas_src>
import functools
import math

import jax
import jax.numpy as jnp
from jax.experimental import pallas as pl
from jax.experimental.pallas import tpu as pltpu


def _gelu_tanh(x):
    # tanh-approximate GELU: tanh lands on the (otherwise idle) EUP slot instead of
    # erf's long VPU polynomial.  Python-float constants are weakly typed, so the
    # whole expression stays in x.dtype (bf16 on v6e/v7x, f32 on v5e).
    return 0.5 * x * (1.0 + jnp.tanh(0.7978845608028654
                                     * (x + 0.044715 * x * x * x)))


def associative_processor_kernel(x_ref, w1_ref, w2_ref, w3_ref, w4_ref,
                                 sp_ref, o_ref, *, hidden_dim, ep_dtype):
    """One (TM, H) row tile of:
         features = LayerNorm(Linear2(GELU(Linear1(x))))
         out      = features + Linear4(GELU(Linear3(features)))
    """
    H = hidden_dim
    x = x_ref[...].astype(jnp.bfloat16)                     # bf16 MXU operand

    sp = sp_ref[...]                                        # (6, 2H) packed f32 params
    b1 = sp[0:1, :]                                         # (1, 2H)
    b2, g, beta, b3, b4 = (sp[r:r + 1, :H] for r in range(1, 6))

    # ---- processor: Linear(H -> 2H) + GELU ---------------------------------
    h = jnp.dot(x, w1_ref[...], preferred_element_type=jnp.float32)
    h = _gelu_tanh((h + b1).astype(ep_dtype))               # bf16 epilogue on v6e/v7x

    # ---- processor: Linear(2H -> H) + LayerNorm(H) -------------------------
    f = jnp.dot(h.astype(jnp.bfloat16), w2_ref[...],
                preferred_element_type=jnp.float32) + b2
    # fused one-pass statistics: var = E[f^2] - mu^2 (both cross-lane reductions
    # pipeline on the XLU instead of reduce -> subtract -> reduce).
    mu = jnp.mean(f, axis=-1, keepdims=True)
    var = jnp.mean(f * f, axis=-1, keepdims=True) - mu * mu
    inv = jax.lax.rsqrt(var + 1e-5)                         # EUP rsqrt, torch eps
    features = (f - mu) * inv * g + beta                    # f32

    # ---- association head: Linear(H -> H) + GELU + Linear(H -> H) ----------
    a = jnp.dot(features.astype(jnp.bfloat16), w3_ref[...],
                preferred_element_type=jnp.float32)
    a = _gelu_tanh((a + b3).astype(ep_dtype))
    a = jnp.dot(a.astype(jnp.bfloat16), w4_ref[...],
                preferred_element_type=jnp.float32) + b4

    # ---- residual add -------------------------------------------------------
    o_ref[...] = (features + a).astype(o_ref.dtype)


# ---------------------------------------------------------------------------
# wrapper helpers
# ---------------------------------------------------------------------------
def _tpu_generation():
    try:
        kind = jax.devices()[0].device_kind.lower()
    except Exception:
        return 0
    if "v7" in kind or "7x" in kind:
        return 7
    if "v6" in kind:
        return 6
    if "v5" in kind:
        return 5
    return 0


def _epilogue_dtype():
    # v6e/v7x VALU/EUP are bf16-native (2x packed rate, half the live bytes for the
    # (TM, 2H) GELU intermediate); v5e and older have no bf16 vector math.
    return jnp.bfloat16 if _tpu_generation() >= 6 else jnp.float32


def _vmem_limit_bytes():
    # generation-aware: ~100 MiB on v5e/v6e (128 MiB physical), ~51 MiB on v7x
    # (64 MiB per TensorCore), instead of a fixed 48 MiB everywhere.
    cap = 128 * 1024 * 1024
    try:
        cap = int(pltpu.get_tpu_info().vmem_capacity_bytes)
    except Exception:
        pass
    return max(32 * 1024 * 1024, min(int(cap * 0.8), 100 * 1024 * 1024))


def _resident_spec(shape):
    """Whole-array block with a constant index_map: fetched once, VMEM-resident
    across all grid steps.  Single-buffered via pl.Buffered(1) -- the default
    pipeline would allocate two copies of every resident weight."""
    index_map = lambda i: (0,) * len(shape)
    if hasattr(pl, "Buffered"):
        try:
            return pl.BlockSpec(shape, index_map, pipeline_mode=pl.Buffered(1))
        except TypeError:   # older jax without pipeline_mode on BlockSpec
            pass
    return pl.BlockSpec(shape, index_map)


def _pick_tm(B, block_rows):
    """Large row tiles for HBM-roofline efficiency, but keep >= 4 grid steps when
    the batch allows so the x/out double-buffering actually overlaps DMA/compute
    (one step per core exposes the weight DMA entirely)."""
    tm = min(block_rows, B)
    if tm != B:
        tm = max(8, (tm // 8) * 8)
    while tm > 128 and pl.cdiv(B, tm) < 4:
        tm = max(128, ((tm // 2) // 8) * 8)
    return tm


def _pack_small_params(params, H):
    """Pack b1 | b2 | ln_g | ln_b | b3 | b4 into one (6, 2H) f32 block: a single
    resident BlockSpec / DMA instead of six (each of which would pad to 8 sublanes
    and be double-buffered)."""
    rows = [jnp.reshape(params["b1"], (1, 2 * H)).astype(jnp.float32)]
    for name in ("b2", "ln_g", "ln_b", "b3", "b4"):
        v = jnp.reshape(params[name], (1, H)).astype(jnp.float32)
        rows.append(jnp.pad(v, ((0, 0), (0, H))))
    return jnp.concatenate(rows, axis=0)


def associative_processor_forward(x, params, *, block_rows=512,
                                  out_dtype=jnp.float32):
    """x: [B, H] (bf16 or f32 -- the kernel casts to bf16 either way, so producing
    x in bf16 halves the streamed HBM bytes with identical numerics).
    params: w1/w2/w3/w4 bf16 [in, out]; biases / LayerNorm params f32.

    Gridded over batch rows: (TM, H) x/out tiles stream through the double-buffered
    pipeline while the weights + packed biases stay VMEM-resident (constant
    index_map, single-buffered)."""
    B, H = x.shape
    w1, w2, w3, w4 = params["w1"], params["w2"], params["w3"], params["w4"]
    small = _pack_small_params(params, H)

    TM = _pick_tm(B, block_rows)
    grid = (pl.cdiv(B, TM),)

    ep_dtype = _epilogue_dtype()

    weight_bytes = sum(int(p.size) * p.dtype.itemsize
                       for p in (w1, w2, w3, w4, small))
    flops = 12 * B * H * H                       # four matmuls: 2*B*H*2H*2 + 2*B*H*H*2
    bytes_accessed = (B * H * x.dtype.itemsize
                      + B * H * jnp.dtype(out_dtype).itemsize + weight_bytes)

    kernel = functools.partial(associative_processor_kernel,
                               hidden_dim=H, ep_dtype=ep_dtype)

    # TODO(synk): for H < 256 the w2/w3/w4 matmuls use <= half of the 256-wide MXU
    #   on v6e/v7x; fold several independent processors into the lane axis (or pad
    #   H to 256 with a masked LayerNorm) to recover MXU occupancy.
    # TODO(synk): for H large enough that resident w1/w2 + spill scratch overflow
    #   v7x's 64 MiB/TC VMEM, add a K/N-tiled variant (second "arbitrary" grid axis
    #   + f32 accumulator scratch) instead of keeping both fully resident.
    return pl.pallas_call(
        kernel,
        out_shape=jax.ShapeDtypeStruct((B, H), out_dtype),
        grid=grid,
        in_specs=[
            pl.BlockSpec((TM, H), lambda i: (i, 0)),        # x: streamed row tiles
            _resident_spec((H, 2 * H)),                     # w1
            _resident_spec((2 * H, H)),                     # w2
            _resident_spec((H, H)),                         # w3
            _resident_spec((H, H)),                         # w4
            _resident_spec((6, 2 * H)),                     # packed b1|b2|ln_g|ln_b|b3|b4
        ],
        out_specs=pl.BlockSpec((TM, H), lambda i: (i, 0)),
        compiler_params=pltpu.CompilerParams(
            dimension_semantics=("parallel",),              # megacore / 2 TCs on v7x
            vmem_limit_bytes=_vmem_limit_bytes(),
        ),
        cost_estimate=pl.CostEstimate(
            flops=flops,
            transcendentals=B * (3 * H + 1),                # two GELUs + rsqrt
            bytes_accessed=bytes_accessed,
        ),
        # TODO(synk): add input_output_aliases={0: 0} when the caller donates x
        #   (requires matching x/out dtypes).
    )(x, w1, w2, w3, w4, small)


# ---------------------------------------------------------------------------
# parameter init + references
# ---------------------------------------------------------------------------
def init_params(key, hidden_dim):
    """PyTorch-default init (uniform +/- 1/sqrt(fan_in)); weights stored [in, out]."""
    ks = jax.random.split(key, 8)
    h, h2 = hidden_dim, hidden_dim * 2

    def linear(kw, kb, fan_in, fan_out):
        bound = 1.0 / math.sqrt(fan_in)
        w = jax.random.uniform(kw, (fan_in, fan_out), jnp.float32, -bound, bound)
        b = jax.random.uniform(kb, (1, fan_out), jnp.float32, -bound, bound)
        return w, b

    w1, b1 = linear(ks[0], ks[1], h, h2)
    w2, b2 = linear(ks[2], ks[3], h2, h)
    w3, b3 = linear(ks[4], ks[5], h, h)
    w4, b4 = linear(ks[6], ks[7], h, h)
    return {"w1": w1, "b1": b1, "w2": w2, "b2": b2,
            "ln_g": jnp.ones((1, h), jnp.float32),
            "ln_b": jnp.zeros((1, h), jnp.float32),
            "w3": w3, "b3": b3, "w4": w4, "b4": b4}


def _reference_forward(x, p, *, match_kernel, ep_dtype=jnp.float32):
    """Plain-JAX reference.  match_kernel=True replicates the kernel's precision
    choices (bf16 MXU operands, ep_dtype GELU epilogue, fused LN stats);
    match_kernel=False is the exact f32 / erf-GELU PyTorch semantics."""
    xf = x.astype(jnp.float32)
    if match_kernel:
        cast = lambda t: t.astype(jnp.bfloat16)
        gelu = lambda t: _gelu_tanh(t.astype(ep_dtype)).astype(jnp.float32)
    else:
        cast = lambda t: t.astype(jnp.float32)
        gelu = lambda t: jax.nn.gelu(t, approximate=False)
    dot = lambda a, b: jnp.dot(cast(a), cast(b), preferred_element_type=jnp.float32)

    h = gelu(dot(xf, p["w1"]) + p["b1"])
    f = dot(h, p["w2"]) + p["b2"]
    mu = jnp.mean(f, axis=-1, keepdims=True)
    if match_kernel:
        var = jnp.mean(f * f, axis=-1, keepdims=True) - mu * mu
    else:
        d = f - mu
        var = jnp.mean(d * d, axis=-1, keepdims=True)
    features = (f - mu) * jax.lax.rsqrt(var + 1e-5) * p["ln_g"] + p["ln_b"]
    a = gelu(dot(features, p["w3"]) + p["b3"])
    a = dot(a, p["w4"]) + p["b4"]
    return features + a


if __name__ == "__main__":
    hidden_dim = 128   # multiple of 128 -> lane-dense tiles; fills the v5e MXU
    batch = 512        # -> grid of 4 row tiles, so the x/out pipeline overlaps

    key = jax.random.PRNGKey(0)
    kp, kx = jax.random.split(key)
    params_f32 = init_params(kp, hidden_dim)

    # Storage contract: bf16 weights (MXU operands), f32 biases / LN params.
    params = dict(params_f32)
    for name in ("w1", "w2", "w3", "w4"):
        params[name] = params_f32[name].astype(jnp.bfloat16)

    # x is produced directly in bf16: the kernel casts to bf16 on its first line
    # anyway, and streaming bf16 halves the HBM bytes on the memory-bound path.
    x = jax.random.normal(kx, (batch, hidden_dim), jnp.float32).astype(jnp.bfloat16)

    out = associative_processor_forward(x, params, block_rows=512)
    jax.block_until_ready(out)
    assert out.shape == (batch, hidden_dim) and out.dtype == jnp.float32

    # Tight check vs a reference replicating the kernel's precision choices.
    ref_same = _reference_forward(x, params_f32, match_kernel=True,
                                  ep_dtype=_epilogue_dtype())
    assert jnp.allclose(out, ref_same, atol=2e-2, rtol=2e-2), (
        float(jnp.max(jnp.abs(out - ref_same))))

    # Loose check vs the exact f32 / erf-GELU module semantics.
    ref_exact = _reference_forward(x, params_f32, match_kernel=False)
    assert jnp.allclose(out, ref_exact, atol=1e-1, rtol=1e-1), (
        float(jnp.max(jnp.abs(out - ref_exact))))

    print("KERNEL_OK")
</pallas_src>

<mosaic_0001>
module attributes {stable_mosaic.version = 11 : i64} {
  func.func @associative_processor_kernel(%arg0: i32, %arg1: memref<128x128xbf16, #tpu.memory_space<vmem>>, %arg2: memref<128x256xbf16, #tpu.memory_space<vmem>>, %arg3: memref<256x128xbf16, #tpu.memory_space<vmem>>, %arg4: memref<128x128xbf16, #tpu.memory_space<vmem>>, %arg5: memref<128x128xbf16, #tpu.memory_space<vmem>>, %arg6: memref<6x256xf32, #tpu.memory_space<vmem>>, %arg7: memref<128x128xf32, #tpu.memory_space<vmem>>) attributes {dimension_semantics = [#tpu.dimension_semantics<parallel>], iteration_bounds = array<i64: 4>, scalar_prefetch = 0 : i64, scratch_operands = 0 : i64, tpu.core_type = #tpu.core_type<tc>, window_params = [{transform_indices = @transform_0, window_bounds = array<i64: 128, 128>}, {pipeline_mode = #tpu.pipeline_mode<synchronous>, transform_indices = @transform_1, window_bounds = array<i64: 128, 256>}, {pipeline_mode = #tpu.pipeline_mode<synchronous>, transform_indices = @transform_2, window_bounds = array<i64: 256, 128>}, {pipeline_mode = #tpu.pipeline_mode<synchronous>, transform_indices = @transform_3, window_bounds = array<i64: 128, 128>}, {pipeline_mode = #tpu.pipeline_mode<synchronous>, transform_indices = @transform_4, window_bounds = array<i64: 128, 128>}, {pipeline_mode = #tpu.pipeline_mode<synchronous>, transform_indices = @transform_5, window_bounds = array<i64: 6, 256>}, {transform_indices = @transform_6, window_bounds = array<i64: 128, 128>}]} {
    %c0 = arith.constant 0 : index
    %c0_0 = arith.constant 0 : index
    %0 = vector.load %arg1[%c0, %c0_0] : memref<128x128xbf16, #tpu.memory_space<vmem>>, vector<128x128xbf16>
    %c0_1 = arith.constant 0 : index
    %c0_2 = arith.constant 0 : index
    %1 = vector.load %arg6[%c0_1, %c0_2] : memref<6x256xf32, #tpu.memory_space<vmem>>, vector<6x256xf32>
    %2 = vector.extract_strided_slice %1 {offsets = [0, 0], sizes = [1, 256], strides = [1, 1]} : vector<6x256xf32> to vector<1x256xf32>
    %3 = vector.extract_strided_slice %1 {offsets = [1, 0], sizes = [1, 128], strides = [1, 1]} : vector<6x256xf32> to vector<1x128xf32>
    %4 = vector.extract_strided_slice %1 {offsets = [2, 0], sizes = [1, 128], strides = [1, 1]} : vector<6x256xf32> to vector<1x128xf32>
    %5 = vector.extract_strided_slice %1 {offsets = [3, 0], sizes = [1, 128], strides = [1, 1]} : vector<6x256xf32> to vector<1x128xf32>
    %6 = vector.extract_strided_slice %1 {offsets = [4, 0], sizes = [1, 128], strides = [1, 1]} : vector<6x256xf32> to vector<1x128xf32>
    %7 = vector.extract_strided_slice %1 {offsets = [5, 0], sizes = [1, 128], strides = [1, 1]} : vector<6x256xf32> to vector<1x128xf32>
    %c0_3 = arith.constant 0 : index
    %c0_4 = arith.constant 0 : index
    %8 = vector.load %arg2[%c0_3, %c0_4] : memref<128x256xbf16, #tpu.memory_space<vmem>>, vector<128x256xbf16>
    %cst = arith.constant dense<0.000000e+00> : vector<128x256xf32>
    %9 = tpu.matmul %0, %8, %cst {dimension_numbers = #tpu.dot_dimension_numbers<[1], [0], [0], [1], [0, 0, 1, 1], [], []>} : vector<128x128xbf16>, vector<128x256xbf16>, vector<128x256xf32> -> vector<128x256xf32>
    %10 = vector.broadcast %2 : vector<1x256xf32> to vector<128x256xf32>
    %11 = arith.addf %9, %10 : vector<128x256xf32>
    %cst_5 = arith.constant 5.000000e-01 : f32
    %12 = vector.broadcast %cst_5 : f32 to vector<128x256xf32>
    %13 = arith.mulf %12, %11 : vector<128x256xf32>
    %cst_6 = arith.constant 4.471500e-02 : f32
    %14 = vector.broadcast %cst_6 : f32 to vector<128x256xf32>
    %15 = arith.mulf %14, %11 : vector<128x256xf32>
    %16 = arith.mulf %15, %11 : vector<128x256xf32>
    %17 = arith.mulf %16, %11 : vector<128x256xf32>
    %18 = arith.addf %11, %17 : vector<128x256xf32>
    %cst_7 = arith.constant 0.797884583 : f32
    %19 = vector.broadcast %cst_7 : f32 to vector<128x256xf32>
    %20 = arith.mulf %19, %18 : vector<128x256xf32>
    %21 = math.tanh %20 : vector<128x256xf32>
    %cst_8 = arith.constant 1.000000e+00 : f32
    %22 = vector.broadcast %cst_8 : f32 to vector<128x256xf32>
    %23 = arith.addf %22, %21 : vector<128x256xf32>
    %24 = arith.mulf %13, %23 : vector<128x256xf32>
    %25 = arith.truncf %24 : vector<128x256xf32> to vector<128x256xbf16>
    %c0_9 = arith.constant 0 : index
    %c0_10 = arith.constant 0 : index
    %26 = vector.load %arg3[%c0_9, %c0_10] : memref<256x128xbf16, #tpu.memory_space<vmem>>, vector<256x128xbf16>
    %cst_11 = arith.constant dense<0.000000e+00> : vector<128x128xf32>
    %27 = tpu.matmul %25, %26, %cst_11 {dimension_numbers = #tpu.dot_dimension_numbers<[1], [0], [0], [1], [0, 0, 1, 1], [], []>} : vector<128x256xbf16>, vector<256x128xbf16>, vector<128x128xf32> -> vector<128x128xf32>
    %28 = vector.broadcast %3 : vector<1x128xf32> to vector<128x128xf32>
    %29 = arith.addf %27, %28 : vector<128x128xf32>
    %cst_12 = arith.constant dense<0.000000e+00> : vector<128xf32>
    %30 = vector.multi_reduction <add>, %29, %cst_12 [1] : vector<128x128xf32> to vector<128xf32>
    %31 = vector.shape_cast %30 : vector<128xf32> to vector<128x1xf32>
    %cst_13 = arith.constant 1.280000e+02 : f32
    %32 = vector.broadcast %cst_13 : f32 to vector<128x1xf32>
    %33 = arith.divf %31, %32 : vector<128x1xf32>
    %34 = arith.mulf %29, %29 : vector<128x128xf32>
    %cst_14 = arith.constant dense<0.000000e+00> : vector<128xf32>
    %35 = vector.multi_reduction <add>, %34, %cst_14 [1] : vector<128x128xf32> to vector<128xf32>
    %36 = vector.shape_cast %35 : vector<128xf32> to vector<128x1xf32>
    %cst_15 = arith.constant 1.280000e+02 : f32
    %37 = vector.broadcast %cst_15 : f32 to vector<128x1xf32>
    %38 = arith.divf %36, %37 : vector<128x1xf32>
    %39 = arith.mulf %33, %33 : vector<128x1xf32>
    %40 = arith.subf %38, %39 : vector<128x1xf32>
    %cst_16 = arith.constant 9.99999974E-6 : f32
    %41 = vector.broadcast %cst_16 : f32 to vector<128x1xf32>
    %42 = arith.addf %40, %41 : vector<128x1xf32>
    %43 = math.rsqrt %42 : vector<128x1xf32>
    %44 = vector.broadcast %33 : vector<128x1xf32> to vector<128x128xf32>
    %45 = arith.subf %29, %44 : vector<128x128xf32>
    %46 = vector.broadcast %43 : vector<128x1xf32> to vector<128x128xf32>
    %47 = arith.mulf %45, %46 : vector<128x128xf32>
    %48 = vector.broadcast %4 : vector<1x128xf32> to vector<128x128xf32>
    %49 = arith.mulf %47, %48 : vector<128x128xf32>
    %50 = vector.broadcast %5 : vector<1x128xf32> to vector<128x128xf32>
    %51 = arith.addf %49, %50 : vector<128x128xf32>
    %52 = arith.truncf %51 : vector<128x128xf32> to vector<128x128xbf16>
    %c0_17 = arith.constant 0 : index
    %c0_18 = arith.constant 0 : index
    %53 = vector.load %arg4[%c0_17, %c0_18] : memref<128x128xbf16, #tpu.memory_space<vmem>>, vector<128x128xbf16>
    %cst_19 = arith.constant dense<0.000000e+00> : vector<128x128xf32>
    %54 = tpu.matmul %52, %53, %cst_19 {dimension_numbers = #tpu.dot_dimension_numbers<[1], [0], [0], [1], [0, 0, 1, 1], [], []>} : vector<128x128xbf16>, vector<128x128xbf16>, vector<128x128xf32> -> vector<128x128xf32>
    %55 = vector.broadcast %6 : vector<1x128xf32> to vector<128x128xf32>
    %56 = arith.addf %54, %55 : vector<128x128xf32>
    %cst_20 = arith.constant 5.000000e-01 : f32
    %57 = vector.broadcast %cst_20 : f32 to vector<128x128xf32>
    %58 = arith.mulf %57, %56 : vector<128x128xf32>
    %cst_21 = arith.constant 4.471500e-02 : f32
    %59 = vector.broadcast %cst_21 : f32 to vector<128x128xf32>
    %60 = arith.mulf %59, %56 : vector<128x128xf32>
    %61 = arith.mulf %60, %56 : vector<128x128xf32>
    %62 = arith.mulf %61, %56 : vector<128x128xf32>
    %63 = arith.addf %56, %62 : vector<128x128xf32>
    %cst_22 = arith.constant 0.797884583 : f32
    %64 = vector.broadcast %cst_22 : f32 to vector<128x128xf32>
    %65 = arith.mulf %64, %63 : vector<128x128xf32>
    %66 = math.tanh %65 : vector<128x128xf32>
    %cst_23 = arith.constant 1.000000e+00 : f32
    %67 = vector.broadcast %cst_23 : f32 to vector<128x128xf32>
    %68 = arith.addf %67, %66 : vector<128x128xf32>
    %69 = arith.mulf %58, %68 : vector<128x128xf32>
    %70 = arith.truncf %69 : vector<128x128xf32> to vector<128x128xbf16>
    %c0_24 = arith.constant 0 : index
    %c0_25 = arith.constant 0 : index
    %71 = vector.load %arg5[%c0_24, %c0_25] : memref<128x128xbf16, #tpu.memory_space<vmem>>, vector<128x128xbf16>
    %cst_26 = arith.constant dense<0.000000e+00> : vector<128x128xf32>
    %72 = tpu.matmul %70, %71, %cst_26 {dimension_numbers = #tpu.dot_dimension_numbers<[1], [0], [0], [1], [0, 0, 1, 1], [], []>} : vector<128x128xbf16>, vector<128x128xbf16>, vector<128x128xf32> -> vector<128x128xf32>
    %73 = vector.broadcast %7 : vector<1x128xf32> to vector<128x128xf32>
    %74 = arith.addf %72, %73 : vector<128x128xf32>
    %75 = arith.addf %51, %74 : vector<128x128xf32>
    %c0_27 = arith.constant 0 : index
    %c0_28 = arith.constant 0 : index
    %76 = vector.load %arg7[%c0_27, %c0_28] : memref<128x128xf32, #tpu.memory_space<vmem>>, vector<128x128xf32>
    tpu.vector_store %arg7[%c0_27, %c0_28], %75 {strides = array<i32>} : memref<128x128xf32, #tpu.memory_space<vmem>>, vector<128x128xf32>,
    return
  }
  func.func @transform_0(%arg0: i32) -> (i32, i32) {
    %c0_i32 = arith.constant 0 : i32
    %c0_i32_0 = arith.constant 0 : i32
    return %arg0, %c0_i32 : i32, i32
  }
  func.func @transform_1(%arg0: i32) -> (i32, i32) {
    %c0_i32 = arith.constant 0 : i32
    %c0_i32_0 = arith.constant 0 : i32
    %c0_i32_1 = arith.constant 0 : i32
    return %c0_i32, %c0_i32_0 : i32, i32
  }
  func.func @transform_2(%arg0: i32) -> (i32, i32) {
    %c0_i32 = arith.constant 0 : i32
    %c0_i32_0 = arith.constant 0 : i32
    %c0_i32_1 = arith.constant 0 : i32
    return %c0_i32, %c0_i32_0 : i32, i32
  }
  func.func @transform_3(%arg0: i32) -> (i32, i32) {
    %c0_i32 = arith.constant 0 : i32
    %c0_i32_0 = arith.constant 0 : i32
    %c0_i32_1 = arith.constant 0 : i32
    return %c0_i32, %c0_i32_0 : i32, i32
  }
  func.func @transform_4(%arg0: i32) -> (i32, i32) {
    %c0_i32 = arith.constant 0 : i32
    %c0_i32_0 = arith.constant 0 : i32
    %c0_i32_1 = arith.constant 0 : i32
    return %c0_i32, %c0_i32_0 : i32, i32
  }
  func.func @transform_5(%arg0: i32) -> (i32, i32) {
    %c0_i32 = arith.constant 0 : i32
    %c0_i32_0 = arith.constant 0 : i32
    %c0_i32_1 = arith.constant 0 : i32
    return %c0_i32, %c0_i32_0 : i32, i32
  }
  func.func @transform_6(%arg0: i32) -> (i32, i32) {
    %c0_i32 = arith.constant 0 : i32
    %c0_i32_0 = arith.constant 0 : i32
    return %arg0, %c0_i32 : i32, i32
  }
}

</mosaic_0001>

<llo_original>
// kernel: tpu_custom_call.1
$region0: #{tpu_custom_call.1}
  #allocation0 [shape = 'u32[]', space=smem, size = 0x4, offset = 0x4, fixed_abs, tag = 'smem constant byte address 0x4 - core index']
  #allocation1 [shape = 'u32[144,128]{1,0:T(1,128)}', space=vmem, size = 0x12000, scoped, tag = 'internal scratch']
  %s0 = inlined_call_operand.hbm [shape: bf16[512,128], index: 0, kind: input, shape index: {}]
  %s1 = inlined_call_operand.hbm [shape: bf16[128,256], index: 1, kind: input, shape index: {}]
  %s2 = inlined_call_operand.hbm [shape: bf16[256,128], index: 2, kind: input, shape index: {}]
  %s3 = inlined_call_operand.hbm [shape: bf16[128,128], index: 3, kind: input, shape index: {}]
  %s4 = inlined_call_operand.hbm [shape: bf16[128,128], index: 4, kind: input, shape index: {}]
  %s5 = inlined_call_operand.hbm [shape: f32[6,256], index: 5, kind: input, shape index: {}]
  %s6 = inlined_call_operand.hbm [shape: f32[512,128], index: 6, kind: output, shape index: {}]
  %s7 = sld [smem:[#allocation0]]
  $region81: #{tpu_custom_call.1} parent=0
    _
  %s9 = ssub.s32 1, %s7
  %s10 = scalar_select 0, %s9, %s7
  $region1: #{tpu_custom_call.1} parent=0
    #allocation2 [shape = 'u8[65536]{0}', space=vmem, size = 0x10000, scoped, tag = 'input window, operand 0']
    #allocation3 [shape = 's32[2]{0}', space=sflag, size = 0x8, scoped, tag = 'scoped memory for tpu_custom_call.1']
    #allocation4 [shape = 's32[2]{0}', space=sflag, size = 0x8, scoped, tag = 'scoped memory for tpu_custom_call.1']
    #allocation5 [shape = 'u8[65536]{0}', space=vmem, size = 0x10000, scoped, tag = 'input window, operand 1, single buffered']
    #allocation6 [shape = 's32[1]{0}', space=sflag, size = 0x4, scoped, tag = 'scoped memory for tpu_custom_call.1']
    #allocation7 [shape = 'u8[65536]{0}', space=vmem, size = 0x10000, scoped, tag = 'input window, operand 2, single buffered']
    #allocation8 [shape = 'u8[32768]{0}', space=vmem, size = 0x8000, scoped, tag = 'input window, operand 3, single buffered']
    #allocation9 [shape = 's32[1]{0}', space=sflag, size = 0x4, scoped, tag = 'scoped memory for tpu_custom_call.1']
    #allocation10 [shape = 'u8[32768]{0}', space=vmem, size = 0x8000, scoped, tag = 'input window, operand 4, single buffered']
    #allocation11 [shape = 'u8[8192]{0}', space=vmem, size = 0x2000, scoped, tag = 'input window, operand 5, single buffered']
    #allocation12 [shape = 's32[1]{0}', space=sflag, size = 0x4, scoped, tag = 'scoped memory for tpu_custom_call.1']
    #allocation13 [shape = 'u8[131072]{0}', space=vmem, size = 0x20000, scoped, tag = 'output window, operand 0']
    %11 = vsyncpa [#allocation3], 0
    %s12 = scalar_lea.sflag [#allocation3], 1
    %13 = vsyncpa %s12, 0
    %14 = vsyncpa [#allocation6], 0
    %15 = vsyncpa [#allocation9], 0
    %16 = vsyncpa [#allocation12], 0
    %17 = vsyncpa [#allocation4], 0
    %s18 = scalar_lea.sflag [#allocation4], 1
    %19 = vsyncpa %s18, 0
    loop: start=0, step=1, limit=6
    $region2: #{tpu_custom_call.1} parent=1 // loop_pre_header
      _
    $region3: #{tpu_custom_call.1} parent=1 // loop_header
      %s21 = sphi 0, %s25
      %p22 = scmp.ge.s32.totalorder %s21, 6
      %s31 = sphi 0, %s33
      %s34 = sphi 0, %s31
      %s35 = sphi 0, %s34
      %s51 = sphi 0, %s35
      %s55 = sphi 0, %s55
      %s57 = sphi 0, %s55
      %s58 = sphi 0, %s57
      %s72 = sphi 0, %s58
      %s76 = sphi 0, %s76
      %s78 = sphi 0, %s76
      %s79 = sphi 0, %s78
      %s93 = sphi 0, %s79
      %s97 = sphi 0, %s97
      %s99 = sphi 0, %s97
      %s100 = sphi 0, %s99
      %s114 = sphi 0, %s100
      %s118 = sphi 0, %s118
      %s120 = sphi 0, %s118
      %s121 = sphi 0, %s120
      %s135 = sphi 0, %s121
      %s139 = sphi 0, %s139
      %s141 = sphi 0, %s139
      %s142 = sphi 0, %s141
      %s156 = sphi 0, %s142
      %s162 = sphi 0, %s164
      %s165 = sphi 0, %s162
      %s166 = sphi 0, %s165
      %s182 = sphi 0, %s166
    $region4: #{tpu_custom_call.1} parent=1 // loop_header_branch
      %24 = sbr.rel (%p22) target = $region8
    $region5: #{tpu_custom_call.1} parent=1 // loop_body
      %s26 = ssub.s32 %s21, 1
      %s27 = ssub.s32 %s21, 2
      %s28 = sadd.s32 %s21, 1
      %s29 = ssub.s32 %s21, %s28
      %p30 = scmp.eq.s32.totalorder %s29, 0
      %s32 = sadd.s32 %s31, 1
      %s33 = scalar_select %p30, %s31, %s32
      %p36 = pneg %p30
      %p37 = scmp.eq.s32.totalorder %s21, 3
      %p38 = por %p36, %p37
      %p39 = scmp.ne.s32.totalorder %s31, %s34
      %p40 = scmp.eq.s32.totalorder %s21, 0
      %p41 = por %p39, %p40
      %p42 = scmp.ne.s32.totalorder %s31, %s34
      %p43 = scmp.eq.s32.totalorder %s26, 3
      %p44 = por %p42, %p43
      %p45 = scmp.ne.s32.totalorder %s34, %s35
      %p46 = scmp.eq.s32.totalorder %s26, 0
      %p47 = por %p45, %p46
      %p48 = scmp.ne.s32.totalorder %s34, %s35
      %p49 = scmp.eq.s32.totalorder %s27, 3
      %p50 = por %p48, %p49
      %p52 = scmp.ne.s32.totalorder %s35, %s51
      %p53 = scmp.eq.s32.totalorder %s27, 0
      %p54 = por %p52, %p53
      %s56 = sadd.s32 %s55, 1
      %p59 = scmp.eq.s32.totalorder %s21, 3
      %p60 = scmp.ne.s32.totalorder %s55, %s57
      %p61 = scmp.eq.s32.totalorder %s21, 0
      %p62 = por %p60, %p61
      %p63 = scmp.ne.s32.totalorder %s55, %s57
      %p64 = scmp.eq.s32.totalorder %s26, 3
      %p65 = por %p63, %p64
      %p66 = scmp.ne.s32.totalorder %s57, %s58
      %p67 = scmp.eq.s32.totalorder %s26, 0
      %p68 = por %p66, %p67
      %p69 = scmp.ne.s32.totalorder %s57, %s58
      %p70 = scmp.eq.s32.totalorder %s27, 3
      %p71 = por %p69, %p70
      %p73 = scmp.ne.s32.totalorder %s58, %s72
      %p74 = scmp.eq.s32.totalorder %s27, 0
      %p75 = por %p73, %p74
      %s77 = sadd.s32 %s76, 1
      %p80 = scmp.eq.s32.totalorder %s21, 3
      %p81 = scmp.ne.s32.totalorder %s76, %s78
      %p82 = scmp.eq.s32.totalorder %s21, 0
      %p83 = por %p81, %p82
      %p84 = scmp.ne.s32.totalorder %s76, %s78
      %p85 = scmp.eq.s32.totalorder %s26, 3
      %p86 = por %p84, %p85
      %p87 = scmp.ne.s32.totalorder %s78, %s79
      %p88 = scmp.eq.s32.totalorder %s26, 0
      %p89 = por %p87, %p88
      %p90 = scmp.ne.s32.totalorder %s78, %s79
      %p91 = scmp.eq.s32.totalorder %s27, 3
      %p92 = por %p90, %p91
      %p94 = scmp.ne.s32.totalorder %s79, %s93
      %p95 = scmp.eq.s32.totalorder %s27, 0
      %p96 = por %p94, %p95
      %s98 = sadd.s32 %s97, 1
      %p101 = scmp.eq.s32.totalorder %s21, 3
      %p102 = scmp.ne.s32.totalorder %s97, %s99
      %p103 = scmp.eq.s32.totalorder %s21, 0
      %p104 = por %p102, %p103
      %p105 = scmp.ne.s32.totalorder %s97, %s99
      %p106 = scmp.eq.s32.totalorder %s26, 3
      %p107 = por %p105, %p106
      %p108 = scmp.ne.s32.totalorder %s99, %s100
      %p109 = scmp.eq.s32.totalorder %s26, 0
      %p110 = por %p108, %p109
      %p111 = scmp.ne.s32.totalorder %s99, %s100
      %p112 = scmp.eq.s32.totalorder %s27, 3
      %p113 = por %p111, %p112
      %p115 = scmp.ne.s32.totalorder %s100, %s114
      %p116 = scmp.eq.s32.totalorder %s27, 0
      %p117 = por %p115, %p116
      %s119 = sadd.s32 %s118, 1
      %p122 = scmp.eq.s32.totalorder %s21, 3
      %p123 = scmp.ne.s32.totalorder %s118, %s120
      %p124 = scmp.eq.s32.totalorder %s21, 0
      %p125 = por %p123, %p124
      %p126 = scmp.ne.s32.totalorder %s118, %s120
      %p127 = scmp.eq.s32.totalorder %s26, 3
      %p128 = por %p126, %p127
      %p129 = scmp.ne.s32.totalorder %s120, %s121
      %p130 = scmp.eq.s32.totalorder %s26, 0
      %p131 = por %p129, %p130
      %p132 = scmp.ne.s32.totalorder %s120, %s121
      %p133 = scmp.eq.s32.totalorder %s27, 3
      %p134 = por %p132, %p133
      %p136 = scmp.ne.s32.totalorder %s121, %s135
      %p137 = scmp.eq.s32.totalorder %s27, 0
      %p138 = por %p136, %p137
      %s140 = sadd.s32 %s139, 1
      %p143 = scmp.eq.s32.totalorder %s21, 3
      %p144 = scmp.ne.s32.totalorder %s139, %s141
      %p145 = scmp.eq.s32.totalorder %s21, 0
      %p146 = por %p144, %p145
      %p147 = scmp.ne.s32.totalorder %s139, %s141
      %p148 = scmp.eq.s32.totalorder %s26, 3
      %p149 = por %p147, %p148
      %p150 = scmp.ne.s32.totalorder %s141, %s142
      %p151 = scmp.eq.s32.totalorder %s26, 0
      %p152 = por %p150, %p151
      %p153 = scmp.ne.s32.totalorder %s141, %s142
      %p154 = scmp.eq.s32.totalorder %s27, 3
      %p155 = por %p153, %p154
      %p157 = scmp.ne.s32.totalorder %s142, %s156
      %p158 = scmp.eq.s32.totalorder %s27, 0
      %p159 = por %p157, %p158
      %s160 = ssub.s32 %s21, %s28
      %p161 = scmp.eq.s32.totalorder %s160, 0
      %s163 = sadd.s32 %s162, 1
      %s164 = scalar_select %p161, %s162, %s163
      %p167 = pneg %p161
      %p168 = scmp.eq.s32.totalorder %s21, 3
      %p169 = por %p167, %p168
      %p170 = scmp.ne.s32.totalorder %s162, %s165
      %p171 = scmp.eq.s32.totalorder %s21, 0
      %p172 = por %p170, %p171
      %p173 = scmp.ne.s32.totalorder %s162, %s165
      %p174 = scmp.eq.s32.totalorder %s26, 3
      %p175 = por %p173, %p174
      %p176 = scmp.ne.s32.totalorder %s165, %s166
      %p177 = scmp.eq.s32.totalorder %s26, 0
      %p178 = por %p176, %p177
      %p179 = scmp.ne.s32.totalorder %s165, %s166
      %p180 = scmp.eq.s32.totalorder %s27, 3
      %p181 = por %p179, %p180
      %p183 = scmp.ne.s32.totalorder %s166, %s182
      %p184 = scmp.eq.s32.totalorder %s27, 0
      %p185 = por %p183, %p184
      %p186 = scmp.le.s32.totalorder 1, %s21
      %p187 = scmp.lt.s32.totalorder %s21, 5
      %p188 = pnand %p186, %p187
      %p189 = pneg %p188
      // Predicated region
      $region9: #{tpu_custom_call.1} parent=5 // pred_check
        _
      $region10: #{tpu_custom_call.1} parent=5 // pred_check_branch
        %191 = sbr.rel (%p188) target = $region12
      $region11: #{tpu_custom_call.1} parent=5 // pred_region
        %s192 = ssub.s32 %s21, 1
        // Predicated region
        $region13: #{tpu_custom_call.1} parent=11 // pred_check
          %p193 = pneg %p68
        $region14: #{tpu_custom_call.1} parent=11 // pred_check_branch
          %195 = sbr.rel (%p193) target = $region16
        $region15: #{tpu_custom_call.1} parent=11 // pred_region
          %s197 = ssub.s32 2048, 2048
          %198 = vsyncadd [#allocation6], %s197
          %s199 = sshll.u32 [#allocation5], 4
          %s200 = int_to_ptr.vmem [resolvable:$true] %s199
          %205 = dma.hbm_to_vmem [thread:$0]  %s1, 2048, %s200, [#allocation6], 128, 128, 8
        $region16: #{tpu_custom_call.1} parent=11 // pred_fallthru
          _
        // Predicated region
        $region17: #{tpu_custom_call.1} parent=11 // pred_check
          %p206 = pneg %p89
        $region18: #{tpu_custom_call.1} parent=11 // pred_check_branch
          %208 = sbr.rel (%p206) target = $region20
        $region19: #{tpu_custom_call.1} parent=11 // pred_region
          %s210 = ssub.s32 2048, 2048
          %211 = vsyncadd [#allocation6], %s210
          %s212 = sshll.u32 [#allocation7], 4
          %s213 = int_to_ptr.vmem [resolvable:$true] %s212
          %218 = dma.hbm_to_vmem [thread:$0]  %s2, 2048, %s213, [#allocation6], 64, 64, 4
        $region20: #{tpu_custom_call.1} parent=11 // pred_fallthru
          _
        // Predicated region
        $region21: #{tpu_custom_call.1} parent=11 // pred_check
          %p219 = pneg %p110
        $region22: #{tpu_custom_call.1} parent=11 // pred_check_branch
          %221 = sbr.rel (%p219) target = $region24
        $region23: #{tpu_custom_call.1} parent=11 // pred_region
          %s223 = ssub.s32 1024, 1024
          %224 = vsyncadd [#allocation9], %s223
          %s225 = sshll.u32 [#allocation8], 4
          %s226 = int_to_ptr.vmem [resolvable:$true] %s225
          %231 = dma.hbm_to_vmem [thread:$0]  %s3, 1024, %s226, [#allocation9], 64, 64, 4
        $region24: #{tpu_custom_call.1} parent=11 // pred_fallthru
          _
        // Predicated region
        $region25: #{tpu_custom_call.1} parent=11 // pred_check
          %p232 = pneg %p131
        $region26: #{tpu_custom_call.1} parent=11 // pred_check_branch
          %234 = sbr.rel (%p232) target = $region28
        $region27: #{tpu_custom_call.1} parent=11 // pred_region
          %s236 = ssub.s32 1024, 1024
          %237 = vsyncadd [#allocation9], %s236
          %s238 = sshll.u32 [#allocation10], 4
          %s239 = int_to_ptr.vmem [resolvable:$true] %s238
          %244 = dma.hbm_to_vmem [thread:$0]  %s4, 1024, %s239, [#allocation9], 64, 64, 4
        $region28: #{tpu_custom_call.1} parent=11 // pred_fallthru
          _
        // Predicated region
        $region29: #{tpu_custom_call.1} parent=11 // pred_check
          %p245 = pneg %p152
        $region30: #{tpu_custom_call.1} parent=11 // pred_check_branch
          %247 = sbr.rel (%p245) target = $region32
        $region31: #{tpu_custom_call.1} parent=11 // pred_region
          %s249 = ssub.s32 256, 256
          %250 = vsyncadd [#allocation12], %s249
          %s252 = sshll.u32 [#allocation11], 4
          %s253 = int_to_ptr.vmem [resolvable:$true] %s252
          %255 = dma.hbm_to_vmem [thread:$0]  %s5, 256, %s253, [#allocation12]
        $region32: #{tpu_custom_call.1} parent=11 // pred_fallthru
          _
      $region12: #{tpu_custom_call.1} parent=5 // pred_fallthru
        _
      %p256 = scmp.lt.s32.totalorder %s21, 4
      // Predicated region
      $region33: #{tpu_custom_call.1} parent=5 // pred_check
        %p257 = pneg %p256
      $region34: #{tpu_custom_call.1} parent=5 // pred_check_branch
        %259 = sbr.rel (%p257) target = $region36
      $region35: #{tpu_custom_call.1} parent=5 // pred_region
        // Predicated region
        $region37: #{tpu_custom_call.1} parent=35 // pred_check
          %p260 = pneg %p41
        $region38: #{tpu_custom_call.1} parent=35 // pred_check_branch
          %262 = sbr.rel (%p260) target = $region40
        $region39: #{tpu_custom_call.1} parent=35 // pred_region
          %s263 = sand.u32 %s31, 1
          %s264 = scalar_lea.sflag [#allocation3], %s263
          %s265 = sand.u32 %s31, 1
          %s266 = smul.addr %s265, 64
          %s267 = scalar_lea.vmem [#allocation2], %s266
          %s268 = smul.u32 16, %s21
          %s270 = ssub.s32 1024, 1024
          %271 = vsyncadd %s264, %s270
          %s272 = smul.addr %s268, 64
          %s273 = scalar_lea.hbm %s0, %s272
          %s274 = sshll.u32 %s267, 4
          %s275 = int_to_ptr.vmem [resolvable:$true] %s274
          %280 = dma.hbm_to_vmem [thread:$0]  %s273, 1024, %s275, %s264, 64, 64, 4
        $region40: #{tpu_custom_call.1} parent=35 // pred_fallthru
          _
      $region36: #{tpu_custom_call.1} parent=5 // pred_fallthru
        _
      %p281 = scmp.le.s32.totalorder 1, %s21
      %p282 = scmp.lt.s32.totalorder %s21, 5
      %p283 = pnand %p281, %p282
      %p284 = pneg %p283
      // Predicated region
      $region41: #{tpu_custom_call.1} parent=5 // pred_check
        _
      $region42: #{tpu_custom_call.1} parent=5 // pred_check_branch
        %286 = sbr.rel (%p283) target = $region44
      $region43: #{tpu_custom_call.1} parent=5 // pred_region
        %s287 = ssub.s32 %s21, 1
        %s288 = sand.u32 %s34, 1
        %s289 = scalar_lea.sflag [#allocation3], %s288
        %s290 = sand.u32 %s34, 1
        %s291 = smul.addr %s290, 64
        %s292 = scalar_lea.vmem [#allocation2], %s291
        // Predicated region
        $region45: #{tpu_custom_call.1} parent=43 // pred_check
          %p293 = pneg %p47
        $region46: #{tpu_custom_call.1} parent=43 // pred_check_branch
          %295 = sbr.rel (%p293) target = $region48
        $region47: #{tpu_custom_call.1} parent=43 // pred_region
          %296 = dma.done %s289, 1024
        $region48: #{tpu_custom_call.1} parent=43 // pred_fallthru
          _
        // Predicated region
        $region49: #{tpu_custom_call.1} parent=43 // pred_check
          %p297 = pneg %p68
        $region50: #{tpu_custom_call.1} parent=43 // pred_check_branch
          %299 = sbr.rel (%p297) target = $region52
        $region51: #{tpu_custom_call.1} parent=43 // pred_region
          %300 = dma.done [#allocation6], 2048
        $region52: #{tpu_custom_call.1} parent=43 // pred_fallthru
          _
        // Predicated region
        $region53: #{tpu_custom_call.1} parent=43 // pred_check
          %p301 = pneg %p89
        $region54: #{tpu_custom_call.1} parent=43 // pred_check_branch
          %303 = sbr.rel (%p301) target = $region56
        $region55: #{tpu_custom_call.1} parent=43 // pred_region
          %304 = dma.done [#allocation6], 2048
        $region56: #{tpu_custom_call.1} parent=43 // pred_fallthru
          _
        // Predicated region
        $region57: #{tpu_custom_call.1} parent=43 // pred_check
          %p305 = pneg %p110
        $region58: #{tpu_custom_call.1} parent=43 // pred_check_branch
          %307 = sbr.rel (%p305) target = $region60
        $region59: #{tpu_custom_call.1} parent=43 // pred_region
          %308 = dma.done [#allocation9], 1024
        $region60: #{tpu_custom_call.1} parent=43 // pred_fallthru
          _
        // Predicated region
        $region61: #{tpu_custom_call.1} parent=43 // pred_check
          %p309 = pneg %p131
        $region62: #{tpu_custom_call.1} parent=43 // pred_check_branch
          %311 = sbr.rel (%p309) target = $region64
        $region63: #{tpu_custom_call.1} parent=43 // pred_region
          %312 = dma.done [#allocation9], 1024
        $region64: #{tpu_custom_call.1} parent=43 // pred_fallthru
          _
        // Predicated region
        $region65: #{tpu_custom_call.1} parent=43 // pred_check
          %p313 = pneg %p152
        $region66: #{tpu_custom_call.1} parent=43 // pred_check_branch
          %315 = sbr.rel (%p313) target = $region68
        $region67: #{tpu_custom_call.1} parent=43 // pred_region
          %316 = dma.done [#allocation12], 256
        $region68: #{tpu_custom_call.1} parent=43 // pred_fallthru
          _
        %s317 = sand.u32 %s34, 1
        %s318 = scalar_lea.sflag [#allocation3], %s317
        %s319 = sand.u32 %s34, 1
        %s320 = smul.addr %s319, 64
        %s321 = scalar_lea.vmem [#allocation2], %s320
        %p322 = pneg %p47
        %p323 = pneg %p44
        %p324 = pneg %p68
        %p325 = pneg %p65
        %p326 = pneg %p89
        %p327 = pneg %p86
        %p328 = pneg %p110
        %p329 = pneg %p107
        %p330 = pneg %p131
        %p331 = pneg %p128
        %p332 = pneg %p152
        %p333 = pneg %p149
        %p334 = pneg %p178
        %p335 = pneg %p175
        %s336 = sand.u32 %s165, 1
        %s337 = scalar_lea.sflag [#allocation4], %s336
        %s338 = sand.u32 %s165, 1
        %s339 = smul.addr %s338, 128
        %s340 = scalar_lea.vmem [#allocation13], %s339
        %s341 = smul.u32 16, %s26
        %s342 = smul.u32 16, %s26
        %v344 = vld [vmem:[%s292] sm:$0xf]
        %v345 = vld [vmem:[%s292 + $0x4] sm:$0xf]
        %v346 = vld [vmem:[%s292 + $0x8] sm:$0xf]
        %v347 = vld [vmem:[%s292 + $0xc] sm:$0xf]
        %v348 = vld [vmem:[%s292 + $0x10] sm:$0xf]
        %v349 = vld [vmem:[%s292 + $0x14] sm:$0xf]
        %v350 = vld [vmem:[%s292 + $0x18] sm:$0xf]
        %v351 = vld [vmem:[%s292 + $0x1c] sm:$0xf]
        %v352 = vld [vmem:[%s292 + $0x20] sm:$0xf]
        %v353 = vld [vmem:[%s292 + $0x24] sm:$0xf]
        %v354 = vld [vmem:[%s292 + $0x28] sm:$0xf]
        %v355 = vld [vmem:[%s292 + $0x2c] sm:$0xf]
        %v356 = vld [vmem:[%s292 + $0x30] sm:$0xf]
        %v357 = vld [vmem:[%s292 + $0x34] sm:$0xf]
        %v358 = vld [vmem:[%s292 + $0x38] sm:$0xf]
        %v359 = vld [vmem:[%s292 + $0x3c] sm:$0xf]
        %v360 = vld [vmem:[#allocation11] sm:$0x3f]
        %v361 = vld [vmem:[#allocation11 + $0x8] sm:$0x3f]
        %v362 = vld [vmem:[#allocation5] sm:$0xff]
        %v363 = vld [vmem:[#allocation5 + $0x8] sm:$0xff]
        %v364 = vld [vmem:[#allocation5 + $0x10] sm:$0xff]
        %v365 = vld [vmem:[#allocation5 + $0x18] sm:$0xff]
        %v366 = vld [vmem:[#allocation5 + $0x20] sm:$0xff]
        %v367 = vld [vmem:[#allocation5 + $0x28] sm:$0xff]
        %v368 = vld [vmem:[#allocation5 + $0x30] sm:$0xff]
        %v369 = vld [vmem:[#allocation5 + $0x38] sm:$0xff]
        %v370 = vld [vmem:[#allocation5 + $0x40] sm:$0xff]
        %v371 = vld [vmem:[#allocation5 + $0x48] sm:$0xff]
        %v372 = vld [vmem:[#allocation5 + $0x50] sm:$0xff]
        %v373 = vld [vmem:[#allocation5 + $0x58] sm:$0xff]
        %v374 = vld [vmem:[#allocation5 + $0x60] sm:$0xff]
        %v375 = vld [vmem:[#allocation5 + $0x68] sm:$0xff]
        %v376 = vld [vmem:[#allocation5 + $0x70] sm:$0xff]
        %v377 = vld [vmem:[#allocation5 + $0x78] sm:$0xff]
        %v378 = vlaneseq
        %v379 = vshrl.u32 %v378, 7
        %v380 = vsub.s32 0, %v379
        %v381 = vrot.slane %v360, %v380
        %v382 = vlaneseq
        %v383 = vshrl.u32 %v382, 7
        %v384 = vsub.s32 0, %v383
        %v385 = vrot.slane %v361, %v384
        %v402 = vunpack.c.l.b16 %v344
        %v403 = vunpack.c.l.b16 %v345
        %v404 = vunpack.c.l.b16 %v346
        %v405 = vunpack.c.l.b16 %v347
        %v406 = vunpack.c.l.b16 %v348
        %v407 = vunpack.c.l.b16 %v349
        %v408 = vunpack.c.l.b16 %v350
        %v409 = vunpack.c.l.b16 %v351
        %v410 = vunpack.c.l.b16 %v352
        %v411 = vunpack.c.l.b16 %v353
        %v412 = vunpack.c.l.b16 %v354
        %v413 = vunpack.c.l.b16 %v355
        %v414 = vunpack.c.l.b16 %v356
        %v415 = vunpack.c.l.b16 %v357
        %v416 = vunpack.c.l.b16 %v358
        %v417 = vunpack.c.l.b16 %v359
        %v418 = vpack.c.b16 %v403, %v402
        %v419 = vpack.c.b16 %v405, %v404
        %v420 = vpack.c.b16 %v407, %v406
        %v421 = vpack.c.b16 %v409, %v408
        %v422 = vpack.c.b16 %v411, %v410
        %v423 = vpack.c.b16 %v413, %v412
        %v424 = vpack.c.b16 %v415, %v414
        %v425 = vpack.c.b16 %v417, %v416
        %v450 = vunpack.c.l.b16 %v362
        %v451 = vunpack.c.h.b16 %v362
        %v452 = vunpack.c.l.b16 %v363
        %v453 = vunpack.c.h.b16 %v363
        %v454 = vunpack.c.l.b16 %v364
        %v455 = vunpack.c.h.b16 %v364
        %v456 = vunpack.c.l.b16 %v365
        %v457 = vunpack.c.h.b16 %v365
        %v458 = vunpack.c.l.b16 %v366
        %v459 = vunpack.c.h.b16 %v366
        %v460 = vunpack.c.l.b16 %v367
        %v461 = vunpack.c.h.b16 %v367
        %v462 = vunpack.c.l.b16 %v368
        %v463 = vunpack.c.h.b16 %v368
        %v464 = vunpack.c.l.b16 %v369
        %v465 = vunpack.c.h.b16 %v369
        %v466 = vunpack.c.l.b16 %v370
        %v467 = vunpack.c.h.b16 %v370
        %v468 = vunpack.c.l.b16 %v371
        %v469 = vunpack.c.h.b16 %v371
        %v470 = vunpack.c.l.b16 %v372
        %v471 = vunpack.c.h.b16 %v372
        %v472 = vunpack.c.l.b16 %v373
        %v473 = vunpack.c.h.b16 %v373
        %v474 = vunpack.c.l.b16 %v374
        %v475 = vunpack.c.h.b16 %v374
        %v476 = vunpack.c.l.b16 %v375
        %v477 = vunpack.c.h.b16 %v375
        %v478 = vunpack.c.l.b16 %v376
        %v479 = vunpack.c.h.b16 %v376
        %v480 = vunpack.c.l.b16 %v377
        %v481 = vunpack.c.h.b16 %v377
        %v482 = vpack.c.b16 %v452, %v450
        %v483 = vpack.c.b16 %v453, %v451
        %v484 = vpack.c.b16 %v456, %v454
        %v485 = vpack.c.b16 %v457, %v455
        %v486 = vpack.c.b16 %v460, %v458
        %v487 = vpack.c.b16 %v461, %v459
        %v488 = vpack.c.b16 %v464, %v462
        %v489 = vpack.c.b16 %v465, %v463
        %v490 = vpack.c.b16 %v468, %v466
        %v491 = vpack.c.b16 %v469, %v467
        %v492 = vpack.c.b16 %v472, %v470
        %v493 = vpack.c.b16 %v473, %v471
        %v494 = vpack.c.b16 %v476, %v474
        %v495 = vpack.c.b16 %v477, %v475
        %v496 = vpack.c.b16 %v480, %v478
        %v497 = vpack.c.b16 %v481, %v479
        %514 = vmatprep.subr.bf16.mxu0 %v497
        %515 = vmatpush1.bf16.msra.mxu0 %v496
        %516 = vmatprep.subr.bf16.mxu0 %v495
        %517 = vmatpush1.bf16.msra.mxu0 %v494
        %518 = vmatprep.subr.bf16.mxu0 %v493
        %519 = vmatpush1.bf16.msra.mxu0 %v492
        %520 = vmatprep.subr.bf16.mxu0 %v491
        %521 = vmatpush1.bf16.msra.mxu0 %v490
        %522 = vmatprep.subr.bf16.mxu0 %v489
        %523 = vmatpush1.bf16.msra.mxu0 %v488
        %524 = vmatprep.subr.bf16.mxu0 %v487
        %525 = vmatpush1.bf16.msra.mxu0 %v486
        %526 = vmatprep.subr.bf16.mxu0 %v485
        %527 = vmatpush1.bf16.msra.mxu0 %v484
        %528 = vmatprep.subr.bf16.mxu0 %v483
        %529 = vmatpush1.bf16.msra.mxu0 %v482
        %530 = vmatprep.subr.bf16.mxu0 0
        %531 = vmatpush2.bf16.msra.mxu0 0
        %532 = vmatprep.subr.bf16.mxu0 0
        %533 = vmatpush2.bf16.msra.mxu0 0
        %534 = vmatprep.subr.bf16.mxu0 0
        %535 = vmatpush2.bf16.msra.mxu0 0
        %536 = vmatprep.subr.bf16.mxu0 0
        %537 = vmatpush2.bf16.msra.mxu0 0
        %538 = vmatprep.subr.bf16.mxu0 0
        %539 = vmatpush2.bf16.msra.mxu0 0
        %540 = vmatprep.subr.bf16.mxu0 0
        %541 = vmatpush2.bf16.msra.mxu0 0
        %542 = vmatprep.subr.bf16.mxu0 0
        %543 = vmatpush2.bf16.msra.mxu0 0
        %544 = vmatprep.subr.bf16.mxu0 0
        %545 = vmatpush2.bf16.msra.mxu0 0
        %546 = vmatprep.mubr.bf16.mxu0 0
        %547 = vmatmul.mubr.bf16.gmra.mxu0 %v418
        %v548 = vpop.f32.mrf.mxu0
        %v549 = vadd.f32 %v381, %v548
        %v550 = vpop.f32.mrf.mxu0
        %v551 = vadd.f32 %v385, %v550
        %v552 = vpop.f32.mrf.mxu0
        %v553 = vadd.f32 %v381, %v552
        %v554 = vpop.f32.mrf.mxu0
        %v555 = vadd.f32 %v385, %v554
        %556 = vmatprep.mubr.bf16.mxu0 0
        %557 = vmatmul.mubr.bf16.gmra.mxu0 %v419
        %v558 = vpop.f32.mrf.mxu0
        %v559 = vadd.f32 %v381, %v558
        %v560 = vpop.f32.mrf.mxu0
        %v561 = vadd.f32 %v385, %v560
        %v562 = vpop.f32.mrf.mxu0
        %v563 = vadd.f32 %v381, %v562
        %v564 = vpop.f32.mrf.mxu0
        %v565 = vadd.f32 %v385, %v564
        %566 = vmatprep.mubr.bf16.mxu0 0
        %567 = vmatmul.mubr.bf16.gmra.mxu0 %v420
        %v568 = vpop.f32.mrf.mxu0
        %v569 = vadd.f32 %v381, %v568
        %v570 = vpop.f32.mrf.mxu0
        %v571 = vadd.f32 %v385, %v570
        %v572 = vpop.f32.mrf.mxu0
        %v573 = vadd.f32 %v381, %v572
        %v574 = vpop.f32.mrf.mxu0
        %v575 = vadd.f32 %v385, %v574
        %576 = vmatprep.mubr.bf16.mxu0 0
        %577 = vmatmul.mubr.bf16.gmra.mxu0 %v421
        %v578 = vpop.f32.mrf.mxu0
        %v579 = vadd.f32 %v381, %v578
        %v580 = vpop.f32.mrf.mxu0
        %v581 = vadd.f32 %v385, %v580
        %v582 = vpop.f32.mrf.mxu0
        %v583 = vadd.f32 %v381, %v582
        %v584 = vpop.f32.mrf.mxu0
        %v585 = vadd.f32 %v385, %v584
        %586 = vmatprep.mubr.bf16.mxu0 0
        %587 = vmatmul.mubr.bf16.gmra.mxu0 %v422
        %v588 = vpop.f32.mrf.mxu0
        %v589 = vadd.f32 %v381, %v588
        %v590 = vpop.f32.mrf.mxu0
        %v591 = vadd.f32 %v385, %v590
        %v592 = vpop.f32.mrf.mxu0
        %v593 = vadd.f32 %v381, %v592
        %v594 = vpop.f32.mrf.mxu0
        %v595 = vadd.f32 %v385, %v594
        %596 = vmatprep.mubr.bf16.mxu0 0
        %597 = vmatmul.mubr.bf16.gmra.mxu0 %v423
        %v598 = vpop.f32.mrf.mxu0
        %v599 = vadd.f32 %v381, %v598
        %v600 = vpop.f32.mrf.mxu0
        %v601 = vadd.f32 %v385, %v600
        %v602 = vpop.f32.mrf.mxu0
        %v603 = vadd.f32 %v381, %v602
        %v604 = vpop.f32.mrf.mxu0
        %v605 = vadd.f32 %v385, %v604
        %606 = vmatprep.mubr.bf16.mxu0 0
        %607 = vmatmul.mubr.bf16.gmra.mxu0 %v424
        %v608 = vpop.f32.mrf.mxu0
        %v609 = vadd.f32 %v381, %v608
        %v610 = vpop.f32.mrf.mxu0
        %v611 = vadd.f32 %v385, %v610
        %v612 = vpop.f32.mrf.mxu0
        %v613 = vadd.f32 %v381, %v612
        %v614 = vpop.f32.mrf.mxu0
        %v615 = vadd.f32 %v385, %v614
        %616 = vmatprep.mubr.bf16.mxu0 0
        %617 = vmatmul.mubr.bf16.gmra.mxu0 %v425
        %v618 = vpop.f32.mrf.mxu0
        %v619 = vadd.f32 %v381, %v618
        %v620 = vpop.f32.mrf.mxu0
        %v621 = vadd.f32 %v385, %v620
        %v622 = vpop.f32.mrf.mxu0
        %v623 = vadd.f32 %v381, %v622
        %v624 = vpop.f32.mrf.mxu0
        %v625 = vadd.f32 %v385, %v624
        %626 = vdwg.mxu0
        %v627 = vmul.f32 %v549, 0.5
        %v628 = vmul.f32 %v551, 0.5
        %v629 = vmul.f32 %v553, 0.5
        %v630 = vmul.f32 %v555, 0.5
        %v631 = vmul.f32 %v559, 0.5
        %v632 = vmul.f32 %v561, 0.5
        %v633 = vmul.f32 %v563, 0.5
        %v634 = vmul.f32 %v565, 0.5
        %v635 = vmul.f32 %v569, 0.5
        %v636 = vmul.f32 %v571, 0.5
        %v637 = vmul.f32 %v573, 0.5
        %v638 = vmul.f32 %v575, 0.5
        %v639 = vmul.f32 %v579, 0.5
        %v640 = vmul.f32 %v581, 0.5
        %v641 = vmul.f32 %v583, 0.5
        %v642 = vmul.f32 %v585, 0.5
        %v643 = vmul.f32 %v589, 0.5
        %v644 = vmul.f32 %v591, 0.5
        %v645 = vmul.f32 %v593, 0.5
        %v646 = vmul.f32 %v595, 0.5
        %v647 = vmul.f32 %v599, 0.5
        %v648 = vmul.f32 %v601, 0.5
        %v649 = vmul.f32 %v603, 0.5
        %v650 = vmul.f32 %v605, 0.5
        %v651 = vmul.f32 %v609, 0.5
        %v652 = vmul.f32 %v611, 0.5
        %v653 = vmul.f32 %v613, 0.5
        %v654 = vmul.f32 %v615, 0.5
        %v655 = vmul.f32 %v619, 0.5
        %v656 = vmul.f32 %v621, 0.5
        %v657 = vmul.f32 %v623, 0.5
        %v658 = vmul.f32 %v625, 0.5
        %v659 = vmul.f32 %v549, 0.044715
        %v660 = vmul.f32 %v551, 0.044715
        %v661 = vmul.f32 %v553, 0.044715
        %v662 = vmul.f32 %v555, 0.044715
        %v663 = vmul.f32 %v559, 0.044715
        %v664 = vmul.f32 %v561, 0.044715
        %v665 = vmul.f32 %v563, 0.044715
        %v666 = vmul.f32 %v565, 0.044715
        %v667 = vmul.f32 %v569, 0.044715
        %v668 = vmul.f32 %v571, 0.044715
        %v669 = vmul.f32 %v573, 0.044715
        %v670 = vmul.f32 %v575, 0.044715
        %v671 = vmul.f32 %v579, 0.044715
        %v672 = vmul.f32 %v581, 0.044715
        %v673 = vmul.f32 %v583, 0.044715
        %v674 = vmul.f32 %v585, 0.044715
        %v675 = vmul.f32 %v589, 0.044715
        %v676 = vmul.f32 %v591, 0.044715
        %v677 = vmul.f32 %v593, 0.044715
        %v678 = vmul.f32 %v595, 0.044715
        %v679 = vmul.f32 %v599, 0.044715
        %v680 = vmul.f32 %v601, 0.044715
        %v681 = vmul.f32 %v603, 0.044715
        %v682 = vmul.f32 %v605, 0.044715
        %v683 = vmul.f32 %v609, 0.044715
        %v684 = vmul.f32 %v611, 0.044715
        %v685 = vmul.f32 %v613, 0.044715
        %v686 = vmul.f32 %v615, 0.044715
        %v687 = vmul.f32 %v619, 0.044715
        %v688 = vmul.f32 %v621, 0.044715
        %v689 = vmul.f32 %v623, 0.044715
        %v690 = vmul.f32 %v625, 0.044715
        %v691 = vmul.f32 %v659, %v549
        %v692 = vmul.f32 %v660, %v551
        %v693 = vmul.f32 %v661, %v553
        %v694 = vmul.f32 %v662, %v555
        %v695 = vmul.f32 %v663, %v559
        %v696 = vmul.f32 %v664, %v561
        %v697 = vmul.f32 %v665, %v563
        %v698 = vmul.f32 %v666, %v565
        %v699 = vmul.f32 %v667, %v569
        %v700 = vmul.f32 %v668, %v571
        %v701 = vmul.f32 %v669, %v573
        %v702 = vmul.f32 %v670, %v575
        %v703 = vmul.f32 %v671, %v579
        %v704 = vmul.f32 %v672, %v581
        %v705 = vmul.f32 %v673, %v583
        %v706 = vmul.f32 %v674, %v585
        %v707 = vmul.f32 %v675, %v589
        %v708 = vmul.f32 %v676, %v591
        %v709 = vmul.f32 %v677, %v593
        %v710 = vmul.f32 %v678, %v595
        %v711 = vmul.f32 %v679, %v599
        %v712 = vmul.f32 %v680, %v601
        %v713 = vmul.f32 %v681, %v603
        %v714 = vmul.f32 %v682, %v605
        %v715 = vmul.f32 %v683, %v609
        %v716 = vmul.f32 %v684, %v611
        %v717 = vmul.f32 %v685, %v613
        %v718 = vmul.f32 %v686, %v615
        %v719 = vmul.f32 %v687, %v619
        %v720 = vmul.f32 %v688, %v621
        %v721 = vmul.f32 %v689, %v623
        %v722 = vmul.f32 %v690, %v625
        %v723 = vmul.f32 %v691, %v549
        %v724 = vmul.f32 %v692, %v551
        %v725 = vmul.f32 %v693, %v553
        %v726 = vmul.f32 %v694, %v555
        %v727 = vmul.f32 %v695, %v559
        %v728 = vmul.f32 %v696, %v561
        %v729 = vmul.f32 %v697, %v563
        %v730 = vmul.f32 %v698, %v565
        %v731 = vmul.f32 %v699, %v569
        %v732 = vmul.f32 %v700, %v571
        %v733 = vmul.f32 %v701, %v573
        %v734 = vmul.f32 %v702, %v575
        %v735 = vmul.f32 %v703, %v579
        %v736 = vmul.f32 %v704, %v581
        %v737 = vmul.f32 %v705, %v583
        %v738 = vmul.f32 %v706, %v585
        %v739 = vmul.f32 %v707, %v589
        %v740 = vmul.f32 %v708, %v591
        %v741 = vmul.f32 %v709, %v593
        %v742 = vmul.f32 %v710, %v595
        %v743 = vmul.f32 %v711, %v599
        %v744 = vmul.f32 %v712, %v601
        %v745 = vmul.f32 %v713, %v603
        %v746 = vmul.f32 %v714, %v605
        %v747 = vmul.f32 %v715, %v609
        %v748 = vmul.f32 %v716, %v611
        %v749 = vmul.f32 %v717, %v613
        %v750 = vmul.f32 %v718, %v615
        %v751 = vmul.f32 %v719, %v619
        %v752 = vmul.f32 %v720, %v621
        %v753 = vmul.f32 %v721, %v623
        %v754 = vmul.f32 %v722, %v625
        %v755 = vadd.f32 %v549, %v723
        %v756 = vadd.f32 %v551, %v724
        %v757 = vadd.f32 %v553, %v725
        %v758 = vadd.f32 %v555, %v726
        %v759 = vadd.f32 %v559, %v727
        %v760 = vadd.f32 %v561, %v728
        %v761 = vadd.f32 %v563, %v729
        %v762 = vadd.f32 %v565, %v730
        %v763 = vadd.f32 %v569, %v731
        %v764 = vadd.f32 %v571, %v732
        %v765 = vadd.f32 %v573, %v733
        %v766 = vadd.f32 %v575, %v734
        %v767 = vadd.f32 %v579, %v735
        %v768 = vadd.f32 %v581, %v736
        %v769 = vadd.f32 %v583, %v737
        %v770 = vadd.f32 %v585, %v738
        %v771 = vadd.f32 %v589, %v739
        %v772 = vadd.f32 %v591, %v740
        %v773 = vadd.f32 %v593, %v741
        %v774 = vadd.f32 %v595, %v742
        %v775 = vadd.f32 %v599, %v743
        %v776 = vadd.f32 %v601, %v744
        %v777 = vadd.f32 %v603, %v745
        %v778 = vadd.f32 %v605, %v746
        %v779 = vadd.f32 %v609, %v747
        %v780 = vadd.f32 %v611, %v748
        %v781 = vadd.f32 %v613, %v749
        %v782 = vadd.f32 %v615, %v750
        %v783 = vadd.f32 %v619, %v751
        %v784 = vadd.f32 %v621, %v752
        %v785 = vadd.f32 %v623, %v753
        %v786 = vadd.f32 %v625, %v754
        %v787 = vmul.f32 %v755, 0.7978846
        %v788 = vmul.f32 %v756, 0.7978846
        %v789 = vmul.f32 %v757, 0.7978846
        %v790 = vmul.f32 %v758, 0.7978846
        %v791 = vmul.f32 %v759, 0.7978846
        %v792 = vmul.f32 %v760, 0.7978846
        %v793 = vmul.f32 %v761, 0.7978846
        %v794 = vmul.f32 %v762, 0.7978846
        %v795 = vmul.f32 %v763, 0.7978846
        %v796 = vmul.f32 %v764, 0.7978846
        %v797 = vmul.f32 %v765, 0.7978846
        %v798 = vmul.f32 %v766, 0.7978846
        %v799 = vmul.f32 %v767, 0.7978846
        %v800 = vmul.f32 %v768, 0.7978846
        %v801 = vmul.f32 %v769, 0.7978846
        %v802 = vmul.f32 %v770, 0.7978846
        %v803 = vmul.f32 %v771, 0.7978846
        %v804 = vmul.f32 %v772, 0.7978846
        %v805 = vmul.f32 %v773, 0.7978846
        %v806 = vmul.f32 %v774, 0.7978846
        %v807 = vmul.f32 %v775, 0.7978846
        %v808 = vmul.f32 %v776, 0.7978846
        %v809 = vmul.f32 %v777, 0.7978846
        %v810 = vmul.f32 %v778, 0.7978846
        %v811 = vmul.f32 %v779, 0.7978846
        %v812 = vmul.f32 %v780, 0.7978846
        %v813 = vmul.f32 %v781, 0.7978846
        %v814 = vmul.f32 %v782, 0.7978846
        %v815 = vmul.f32 %v783, 0.7978846
        %v816 = vmul.f32 %v784, 0.7978846
        %v817 = vmul.f32 %v785, 0.7978846
        %v818 = vmul.f32 %v786, 0.7978846
        %v819 = vtanh.pop %v787
        %v820 = vtanh.pop %v788
        %v821 = vtanh.pop %v789
        %v822 = vtanh.pop %v790
        %v823 = vtanh.pop %v791
        %v824 = vtanh.pop %v792
        %v825 = vtanh.pop %v793
        %v826 = vtanh.pop %v794
        %v827 = vtanh.pop %v795
        %v828 = vtanh.pop %v796
        %v829 = vtanh.pop %v797
        %v830 = vtanh.pop %v798
        %v831 = vtanh.pop %v799
        %v832 = vtanh.pop %v800
        %v833 = vtanh.pop %v801
        %v834 = vtanh.pop %v802
        %v835 = vtanh.pop %v803
        %v836 = vtanh.pop %v804
        %v837 = vtanh.pop %v805
        %v838 = vtanh.pop %v806
        %v839 = vtanh.pop %v807
        %v840 = vtanh.pop %v808
        %v841 = vtanh.pop %v809
        %v842 = vtanh.pop %v810
        %v843 = vtanh.pop %v811
        %v844 = vtanh.pop %v812
        %v845 = vtanh.pop %v813
        %v846 = vtanh.pop %v814
        %v847 = vtanh.pop %v815
        %v848 = vtanh.pop %v816
        %v849 = vtanh.pop %v817
        %v850 = vtanh.pop %v818
        %v851 = vadd.f32 %v819, 1.0
        %v852 = vadd.f32 %v820, 1.0
        %v853 = vadd.f32 %v821, 1.0
        %v854 = vadd.f32 %v822, 1.0
        %v855 = vadd.f32 %v823, 1.0
        %v856 = vadd.f32 %v824, 1.0
        %v857 = vadd.f32 %v825, 1.0
        %v858 = vadd.f32 %v826, 1.0
        %v859 = vadd.f32 %v827, 1.0
        %v860 = vadd.f32 %v828, 1.0
        %v861 = vadd.f32 %v829, 1.0
        %v862 = vadd.f32 %v830, 1.0
        %v863 = vadd.f32 %v831, 1.0
        %v864 = vadd.f32 %v832, 1.0
        %v865 = vadd.f32 %v833, 1.0
        %v866 = vadd.f32 %v834, 1.0
        %v867 = vadd.f32 %v835, 1.0
        %v868 = vadd.f32 %v836, 1.0
        %v869 = vadd.f32 %v837, 1.0
        %v870 = vadd.f32 %v838, 1.0
        %v871 = vadd.f32 %v839, 1.0
        %v872 = vadd.f32 %v840, 1.0
        %v873 = vadd.f32 %v841, 1.0
        %v874 = vadd.f32 %v842, 1.0
        %v875 = vadd.f32 %v843, 1.0
        %v876 = vadd.f32 %v844, 1.0
        %v877 = vadd.f32 %v845, 1.0
        %v878 = vadd.f32 %v846, 1.0
        %v879 = vadd.f32 %v847, 1.0
        %v880 = vadd.f32 %v848, 1.0
        %v881 = vadd.f32 %v849, 1.0
        %v882 = vadd.f32 %v850, 1.0
        %v883 = vmul.f32 %v627, %v851
        %v884 = vmul.f32 %v628, %v852
        %v885 = vmul.f32 %v629, %v853
        %v886 = vmul.f32 %v630, %v854
        %v887 = vmul.f32 %v631, %v855
        %v888 = vmul.f32 %v632, %v856
        %v889 = vmul.f32 %v633, %v857
        %v890 = vmul.f32 %v634, %v858
        %v891 = vmul.f32 %v635, %v859
        %v892 = vmul.f32 %v636, %v860
        %v893 = vmul.f32 %v637, %v861
        %v894 = vmul.f32 %v638, %v862
        %v895 = vmul.f32 %v639, %v863
        %v896 = vmul.f32 %v640, %v864
        %v897 = vmul.f32 %v641, %v865
        %v898 = vmul.f32 %v642, %v866
        %v899 = vmul.f32 %v643, %v867
        %v900 = vmul.f32 %v644, %v868
        %v901 = vmul.f32 %v645, %v869
        %v902 = vmul.f32 %v646, %v870
        %v903 = vmul.f32 %v647, %v871
        %v904 = vmul.f32 %v648, %v872
        %v905 = vmul.f32 %v649, %v873
        %v906 = vmul.f32 %v650, %v874
        %v907 = vmul.f32 %v651, %v875
        %v908 = vmul.f32 %v652, %v876
        %v909 = vmul.f32 %v653, %v877
        %v910 = vmul.f32 %v654, %v878
        %v911 = vmul.f32 %v655, %v879
        %v912 = vmul.f32 %v656, %v880
        %v913 = vmul.f32 %v657, %v881
        %v914 = vmul.f32 %v658, %v882
        %v915 = vpack.c.bf16 %v885, %v883
        %v916 = vpack.c.bf16 %v886, %v884
        %v917 = vpack.c.bf16 %v889, %v887
        %v918 = vpack.c.bf16 %v890, %v888
        %v919 = vpack.c.bf16 %v893, %v891
        %v920 = vpack.c.bf16 %v894, %v892
        %v921 = vpack.c.bf16 %v897, %v895
        %v922 = vpack.c.bf16 %v898, %v896
        %v923 = vpack.c.bf16 %v901, %v899
        %v924 = vpack.c.bf16 %v902, %v900
        %v925 = vpack.c.bf16 %v905, %v903
        %v926 = vpack.c.bf16 %v906, %v904
        %v927 = vpack.c.bf16 %v909, %v907
        %v928 = vpack.c.bf16 %v910, %v908
        %v929 = vpack.c.bf16 %v913, %v911
        %v930 = vpack.c.bf16 %v914, %v912
        %v931 = vld [vmem:[#allocation7] sm:$0xf]
        %v932 = vld [vmem:[#allocation7 + $0x4] sm:$0xf]
        %v933 = vld [vmem:[#allocation7 + $0x8] sm:$0xf]
        %v934 = vld [vmem:[#allocation7 + $0xc] sm:$0xf]
        %v935 = vld [vmem:[#allocation7 + $0x10] sm:$0xf]
        %v936 = vld [vmem:[#allocation7 + $0x14] sm:$0xf]
        %v937 = vld [vmem:[#allocation7 + $0x18] sm:$0xf]
        %v938 = vld [vmem:[#allocation7 + $0x1c] sm:$0xf]
        %v939 = vld [vmem:[#allocation7 + $0x20] sm:$0xf]
        %v940 = vld [vmem:[#allocation7 + $0x24] sm:$0xf]
        %v941 = vld [vmem:[#allocation7 + $0x28] sm:$0xf]
        %v942 = vld [vmem:[#allocation7 + $0x2c] sm:$0xf]
        %v943 = vld [vmem:[#allocation7 + $0x30] sm:$0xf]
        %v944 = vld [vmem:[#allocation7 + $0x34] sm:$0xf]
        %v945 = vld [vmem:[#allocation7 + $0x38] sm:$0xf]
        %v946 = vld [vmem:[#allocation7 + $0x3c] sm:$0xf]
        %v947 = vld [vmem:[#allocation7 + $0x40] sm:$0xf]
        %v948 = vld [vmem:[#allocation7 + $0x44] sm:$0xf]
        %v949 = vld [vmem:[#allocation7 + $0x48] sm:$0xf]
        %v950 = vld [vmem:[#allocation7 + $0x4c] sm:$0xf]
        %v951 = vld [vmem:[#allocation7 + $0x50] sm:$0xf]
        %v952 = vld [vmem:[#allocation7 + $0x54] sm:$0xf]
        %v953 = vld [vmem:[#allocation7 + $0x58] sm:$0xf]
        %v954 = vld [vmem:[#allocation7 + $0x5c] sm:$0xf]
        %v955 = vld [vmem:[#allocation7 + $0x60] sm:$0xf]
        %v956 = vld [vmem:[#allocation7 + $0x64] sm:$0xf]
        %v957 = vld [vmem:[#allocation7 + $0x68] sm:$0xf]
        %v958 = vld [vmem:[#allocation7 + $0x6c] sm:$0xf]
        %v959 = vld [vmem:[#allocation7 + $0x70] sm:$0xf]
        %v960 = vld [vmem:[#allocation7 + $0x74] sm:$0xf]
        %v961 = vld [vmem:[#allocation7 + $0x78] sm:$0xf]
        %v962 = vld [vmem:[#allocation7 + $0x7c] sm:$0xf]
        %v963 = vlaneseq
        %v964 = vshrl.u32 %v963, 7
        %v965 = vsub.s32 1, %v964
        %v966 = vrot.slane %v360, %v965
        %v999 = vunpack.c.l.b16 %v931
        %v1000 = vunpack.c.l.b16 %v932
        %v1001 = vunpack.c.l.b16 %v933
        %v1002 = vunpack.c.l.b16 %v934
        %v1003 = vunpack.c.l.b16 %v935
        %v1004 = vunpack.c.l.b16 %v936
        %v1005 = vunpack.c.l.b16 %v937
        %v1006 = vunpack.c.l.b16 %v938
        %v1007 = vunpack.c.l.b16 %v939
        %v1008 = vunpack.c.l.b16 %v940
        %v1009 = vunpack.c.l.b16 %v941
        %v1010 = vunpack.c.l.b16 %v942
        %v1011 = vunpack.c.l.b16 %v943
        %v1012 = vunpack.c.l.b16 %v944
        %v1013 = vunpack.c.l.b16 %v945
        %v1014 = vunpack.c.l.b16 %v946
        %v1015 = vunpack.c.l.b16 %v947
        %v1016 = vunpack.c.l.b16 %v948
        %v1017 = vunpack.c.l.b16 %v949
        %v1018 = vunpack.c.l.b16 %v950
        %v1019 = vunpack.c.l.b16 %v951
        %v1020 = vunpack.c.l.b16 %v952
        %v1021 = vunpack.c.l.b16 %v953
        %v1022 = vunpack.c.l.b16 %v954
        %v1023 = vunpack.c.l.b16 %v955
        %v1024 = vunpack.c.l.b16 %v956
        %v1025 = vunpack.c.l.b16 %v957
        %v1026 = vunpack.c.l.b16 %v958
        %v1027 = vunpack.c.l.b16 %v959
        %v1028 = vunpack.c.l.b16 %v960
        %v1029 = vunpack.c.l.b16 %v961
        %v1030 = vunpack.c.l.b16 %v962
        %v1031 = vpack.c.b16 %v1000, %v999
        %v1032 = vpack.c.b16 %v1002, %v1001
        %v1033 = vpack.c.b16 %v1004, %v1003
        %v1034 = vpack.c.b16 %v1006, %v1005
        %v1035 = vpack.c.b16 %v1008, %v1007
        %v1036 = vpack.c.b16 %v1010, %v1009
        %v1037 = vpack.c.b16 %v1012, %v1011
        %v1038 = vpack.c.b16 %v1014, %v1013
        %v1039 = vpack.c.b16 %v1016, %v1015
        %v1040 = vpack.c.b16 %v1018, %v1017
        %v1041 = vpack.c.b16 %v1020, %v1019
        %v1042 = vpack.c.b16 %v1022, %v1021
        %v1043 = vpack.c.b16 %v1024, %v1023
        %v1044 = vpack.c.b16 %v1026, %v1025
        %v1045 = vpack.c.b16 %v1028, %v1027
        %v1046 = vpack.c.b16 %v1030, %v1029
        %1063 = vmatprep.subr.bf16.mxu0 0
        %1064 = vmatpush1.bf16.msra.mxu0 %v1038
        %1065 = vmatprep.subr.bf16.mxu0 0
        %1066 = vmatpush1.bf16.msra.mxu0 %v1037
        %1067 = vmatprep.subr.bf16.mxu0 0
        %1068 = vmatpush1.bf16.msra.mxu0 %v1036
        %1069 = vmatprep.subr.bf16.mxu0 0
        %1070 = vmatpush1.bf16.msra.mxu0 %v1035
        %1071 = vmatprep.subr.bf16.mxu0 0
        %1072 = vmatpush1.bf16.msra.mxu0 %v1034
        %1073 = vmatprep.subr.bf16.mxu0 0
        %1074 = vmatpush1.bf16.msra.mxu0 %v1033
        %1075 = vmatprep.subr.bf16.mxu0 0
        %1076 = vmatpush1.bf16.msra.mxu0 %v1032
        %1077 = vmatprep.subr.bf16.mxu0 0
        %1078 = vmatpush1.bf16.msra.mxu0 %v1031
        %1079 = vmatprep.subr.bf16.mxu0 0
        %1080 = vmatpush2.bf16.msra.mxu0 %v1046
        %1081 = vmatprep.subr.bf16.mxu0 0
        %1082 = vmatpush2.bf16.msra.mxu0 %v1045
        %1083 = vmatprep.subr.bf16.mxu0 0
        %1084 = vmatpush2.bf16.msra.mxu0 %v1044
        %1085 = vmatprep.subr.bf16.mxu0 0
        %1086 = vmatpush2.bf16.msra.mxu0 %v1043
        %1087 = vmatprep.subr.bf16.mxu0 0
        %1088 = vmatpush2.bf16.msra.mxu0 %v1042
        %1089 = vmatprep.subr.bf16.mxu0 0
        %1090 = vmatpush2.bf16.msra.mxu0 %v1041
        %1091 = vmatprep.subr.bf16.mxu0 0
        %1092 = vmatpush2.bf16.msra.mxu0 %v1040
        %1093 = vmatprep.subr.bf16.mxu0 0
        %1094 = vmatpush2.bf16.msra.mxu0 %v1039
        %1095 = vmatprep.mubr.bf16.mxu0 %v916
        %1096 = vmatmul.mubr.bf16.gmra.mxu0 %v915
        %v1097 = vpop.f32.mrf.mxu0
        %v1098 = vadd.f32 %v966, %v1097
        %v1099 = vpop.f32.mrf.mxu0
        %v1100 = vpop.f32.mrf.mxu0
        %v1101 = vadd.f32 %v966, %v1100
        %v1102 = vpop.f32.mrf.mxu0
        %1103 = vmatprep.mubr.bf16.mxu0 %v918
        %1104 = vmatmul.mubr.bf16.gmra.mxu0 %v917
        %v1105 = vpop.f32.mrf.mxu0
        %v1106 = vadd.f32 %v966, %v1105
        %v1107 = vpop.f32.mrf.mxu0
        %v1108 = vpop.f32.mrf.mxu0
        %v1109 = vadd.f32 %v966, %v1108
        %v1110 = vpop.f32.mrf.mxu0
        %1111 = vmatprep.mubr.bf16.mxu0 %v920
        %1112 = vmatmul.mubr.bf16.gmra.mxu0 %v919
        %v1113 = vpop.f32.mrf.mxu0
        %v1114 = vadd.f32 %v966, %v1113
        %v1115 = vpop.f32.mrf.mxu0
        %v1116 = vpop.f32.mrf.mxu0
        %v1117 = vadd.f32 %v966, %v1116
        %v1118 = vpop.f32.mrf.mxu0
        %1119 = vmatprep.mubr.bf16.mxu0 %v922
        %1120 = vmatmul.mubr.bf16.gmra.mxu0 %v921
        %v1121 = vpop.f32.mrf.mxu0
        %v1122 = vadd.f32 %v966, %v1121
        %v1123 = vpop.f32.mrf.mxu0
        %v1124 = vpop.f32.mrf.mxu0
        %v1125 = vadd.f32 %v966, %v1124
        %v1126 = vpop.f32.mrf.mxu0
        %1127 = vmatprep.mubr.bf16.mxu0 %v924
        %1128 = vmatmul.mubr.bf16.gmra.mxu0 %v923
        %v1129 = vpop.f32.mrf.mxu0
        %v1130 = vadd.f32 %v966, %v1129
        %v1131 = vpop.f32.mrf.mxu0
        %v1132 = vpop.f32.mrf.mxu0
        %v1133 = vadd.f32 %v966, %v1132
        %v1134 = vpop.f32.mrf.mxu0
        %1135 = vmatprep.mubr.bf16.mxu0 %v926
        %1136 = vmatmul.mubr.bf16.gmra.mxu0 %v925
        %v1137 = vpop.f32.mrf.mxu0
        %v1138 = vadd.f32 %v966, %v1137
        %v1139 = vpop.f32.mrf.mxu0
        %v1140 = vpop.f32.mrf.mxu0
        %v1141 = vadd.f32 %v966, %v1140
        %v1142 = vpop.f32.mrf.mxu0
        %1143 = vmatprep.mubr.bf16.mxu0 %v928
        %1144 = vmatmul.mubr.bf16.gmra.mxu0 %v927
        %v1145 = vpop.f32.mrf.mxu0
        %v1146 = vadd.f32 %v966, %v1145
        %v1147 = vpop.f32.mrf.mxu0
        %v1148 = vpop.f32.mrf.mxu0
        %v1149 = vadd.f32 %v966, %v1148
        %v1150 = vpop.f32.mrf.mxu0
        %1151 = vmatprep.mubr.bf16.mxu0 %v930
        %1152 = vmatmul.mubr.bf16.gmra.mxu0 %v929
        %v1153 = vpop.f32.mrf.mxu0
        %v1154 = vadd.f32 %v966, %v1153
        %v1155 = vpop.f32.mrf.mxu0
        %v1156 = vpop.f32.mrf.mxu0
        %v1157 = vadd.f32 %v966, %v1156
        %v1158 = vpop.f32.mrf.mxu0
        %1159 = vdwg.mxu0
        %1160 = vadd.xlane.f32.xlu0 %v1098
        %v1161 = vpop.xlane.xlu0 %1160
        %1162 = vadd.xlane.f32.xlu0 %v1101
        %v1163 = vpop.xlane.xlu0 %1162
        %1164 = vadd.xlane.f32.xlu0 %v1106
        %v1165 = vpop.xlane.xlu0 %1164
        %1166 = vadd.xlane.f32.xlu0 %v1109
        %v1167 = vpop.xlane.xlu0 %1166
        %1168 = vadd.xlane.f32.xlu0 %v1114
        %v1169 = vpop.xlane.xlu0 %1168
        %1170 = vadd.xlane.f32.xlu0 %v1117
        %v1171 = vpop.xlane.xlu0 %1170
        %1172 = vadd.xlane.f32.xlu0 %v1122
        %v1173 = vpop.xlane.xlu0 %1172
        %1174 = vadd.xlane.f32.xlu0 %v1125
        %v1175 = vpop.xlane.xlu0 %1174
        %1176 = vadd.xlane.f32.xlu0 %v1130
        %v1177 = vpop.xlane.xlu0 %1176
        %1178 = vadd.xlane.f32.xlu0 %v1133
        %v1179 = vpop.xlane.xlu0 %1178
        %1180 = vadd.xlane.f32.xlu0 %v1138
        %v1181 = vpop.xlane.xlu0 %1180
        %1182 = vadd.xlane.f32.xlu0 %v1141
        %v1183 = vpop.xlane.xlu0 %1182
        %1184 = vadd.xlane.f32.xlu0 %v1146
        %v1185 = vpop.xlane.xlu0 %1184
        %1186 = vadd.xlane.f32.xlu0 %v1149
        %v1187 = vpop.xlane.xlu0 %1186
        %1188 = vadd.xlane.f32.xlu0 %v1154
        %v1189 = vpop.xlane.xlu0 %1188
        %1190 = vadd.xlane.f32.xlu0 %v1157
        %v1191 = vpop.xlane.xlu0 %1190
        %v1192 = vrcp.pop 128.0
        %v1193 = vmul.f32 %v1161, %v1192
        %v1194 = vmul.f32 %v1163, %v1192
        %v1195 = vmul.f32 %v1165, %v1192
        %v1196 = vmul.f32 %v1167, %v1192
        %v1197 = vmul.f32 %v1169, %v1192
        %v1198 = vmul.f32 %v1171, %v1192
        %v1199 = vmul.f32 %v1173, %v1192
        %v1200 = vmul.f32 %v1175, %v1192
        %v1201 = vmul.f32 %v1177, %v1192
        %v1202 = vmul.f32 %v1179, %v1192
        %v1203 = vmul.f32 %v1181, %v1192
        %v1204 = vmul.f32 %v1183, %v1192
        %v1205 = vmul.f32 %v1185, %v1192
        %v1206 = vmul.f32 %v1187, %v1192
        %v1207 = vmul.f32 %v1189, %v1192
        %v1208 = vmul.f32 %v1191, %v1192
        %v1209 = vmul.f32 %v1098, %v1098
        %v1210 = vmul.f32 %v1101, %v1101
        %v1211 = vmul.f32 %v1106, %v1106
        %v1212 = vmul.f32 %v1109, %v1109
        %v1213 = vmul.f32 %v1114, %v1114
        %v1214 = vmul.f32 %v1117, %v1117
        %v1215 = vmul.f32 %v1122, %v1122
        %v1216 = vmul.f32 %v1125, %v1125
        %v1217 = vmul.f32 %v1130, %v1130
        %v1218 = vmul.f32 %v1133, %v1133
        %v1219 = vmul.f32 %v1138, %v1138
        %v1220 = vmul.f32 %v1141, %v1141
        %v1221 = vmul.f32 %v1146, %v1146
        %v1222 = vmul.f32 %v1149, %v1149
        %v1223 = vmul.f32 %v1154, %v1154
        %v1224 = vmul.f32 %v1157, %v1157
        %1225 = vadd.xlane.f32.xlu0 %v1209
        %v1226 = vpop.xlane.xlu0 %1225
        %1227 = vadd.xlane.f32.xlu0 %v1210
        %v1228 = vpop.xlane.xlu0 %1227
        %1229 = vadd.xlane.f32.xlu0 %v1211
        %v1230 = vpop.xlane.xlu0 %1229
        %1231 = vadd.xlane.f32.xlu0 %v1212
        %v1232 = vpop.xlane.xlu0 %1231
        %1233 = vadd.xlane.f32.xlu0 %v1213
        %v1234 = vpop.xlane.xlu0 %1233
        %1235 = vadd.xlane.f32.xlu0 %v1214
        %v1236 = vpop.xlane.xlu0 %1235
        %1237 = vadd.xlane.f32.xlu0 %v1215
        %v1238 = vpop.xlane.xlu0 %1237
        %1239 = vadd.xlane.f32.xlu0 %v1216
        %v1240 = vpop.xlane.xlu0 %1239
        %1241 = vadd.xlane.f32.xlu0 %v1217
        %v1242 = vpop.xlane.xlu0 %1241
        %1243 = vadd.xlane.f32.xlu0 %v1218
        %v1244 = vpop.xlane.xlu0 %1243
        %1245 = vadd.xlane.f32.xlu0 %v1219
        %v1246 = vpop.xlane.xlu0 %1245
        %1247 = vadd.xlane.f32.xlu0 %v1220
        %v1248 = vpop.xlane.xlu0 %1247
        %1249 = vadd.xlane.f32.xlu0 %v1221
        %v1250 = vpop.xlane.xlu0 %1249
        %1251 = vadd.xlane.f32.xlu0 %v1222
        %v1252 = vpop.xlane.xlu0 %1251
        %1253 = vadd.xlane.f32.xlu0 %v1223
        %v1254 = vpop.xlane.xlu0 %1253
        %1255 = vadd.xlane.f32.xlu0 %v1224
        %v1256 = vpop.xlane.xlu0 %1255
        %v1257 = vmul.f32 %v1226, %v1192
        %v1258 = vmul.f32 %v1228, %v1192
        %v1259 = vmul.f32 %v1230, %v1192
        %v1260 = vmul.f32 %v1232, %v1192
        %v1261 = vmul.f32 %v1234, %v1192
        %v1262 = vmul.f32 %v1236, %v1192
        %v1263 = vmul.f32 %v1238, %v1192
        %v1264 = vmul.f32 %v1240, %v1192
        %v1265 = vmul.f32 %v1242, %v1192
        %v1266 = vmul.f32 %v1244, %v1192
        %v1267 = vmul.f32 %v1246, %v1192
        %v1268 = vmul.f32 %v1248, %v1192
        %v1269 = vmul.f32 %v1250, %v1192
        %v1270 = vmul.f32 %v1252, %v1192
        %v1271 = vmul.f32 %v1254, %v1192
        %v1272 = vmul.f32 %v1256, %v1192
        %v1273 = vmul.f32 %v1193, %v1193
        %v1274 = vmul.f32 %v1194, %v1194
        %v1275 = vmul.f32 %v1195, %v1195
        %v1276 = vmul.f32 %v1196, %v1196
        %v1277 = vmul.f32 %v1197, %v1197
        %v1278 = vmul.f32 %v1198, %v1198
        %v1279 = vmul.f32 %v1199, %v1199
        %v1280 = vmul.f32 %v1200, %v1200
        %v1281 = vmul.f32 %v1201, %v1201
        %v1282 = vmul.f32 %v1202, %v1202
        %v1283 = vmul.f32 %v1203, %v1203
        %v1284 = vmul.f32 %v1204, %v1204
        %v1285 = vmul.f32 %v1205, %v1205
        %v1286 = vmul.f32 %v1206, %v1206
        %v1287 = vmul.f32 %v1207, %v1207
        %v1288 = vmul.f32 %v1208, %v1208
        %v1289 = vsub.f32 %v1257, %v1273
        %v1290 = vsub.f32 %v1258, %v1274
        %v1291 = vsub.f32 %v1259, %v1275
        %v1292 = vsub.f32 %v1260, %v1276
        %v1293 = vsub.f32 %v1261, %v1277
        %v1294 = vsub.f32 %v1262, %v1278
        %v1295 = vsub.f32 %v1263, %v1279
        %v1296 = vsub.f32 %v1264, %v1280
        %v1297 = vsub.f32 %v1265, %v1281
        %v1298 = vsub.f32 %v1266, %v1282
        %v1299 = vsub.f32 %v1267, %v1283
        %v1300 = vsub.f32 %v1268, %v1284
        %v1301 = vsub.f32 %v1269, %v1285
        %v1302 = vsub.f32 %v1270, %v1286
        %v1303 = vsub.f32 %v1271, %v1287
        %v1304 = vsub.f32 %v1272, %v1288
        %v1305 = vadd.f32 %v1289, 1e-05
        %v1306 = vadd.f32 %v1290, 1e-05
        %v1307 = vadd.f32 %v1291, 1e-05
        %v1308 = vadd.f32 %v1292, 1e-05
        %v1309 = vadd.f32 %v1293, 1e-05
        %v1310 = vadd.f32 %v1294, 1e-05
        %v1311 = vadd.f32 %v1295, 1e-05
        %v1312 = vadd.f32 %v1296, 1e-05
        %v1313 = vadd.f32 %v1297, 1e-05
        %v1314 = vadd.f32 %v1298, 1e-05
        %v1315 = vadd.f32 %v1299, 1e-05
        %v1316 = vadd.f32 %v1300, 1e-05
        %v1317 = vadd.f32 %v1301, 1e-05
        %v1318 = vadd.f32 %v1302, 1e-05
        %v1319 = vadd.f32 %v1303, 1e-05
        %v1320 = vadd.f32 %v1304, 1e-05
        %v1321 = vrsqrt.pop %v1305
        %v1322 = vrsqrt.pop %v1306
        %v1323 = vrsqrt.pop %v1307
        %v1324 = vrsqrt.pop %v1308
        %v1325 = vrsqrt.pop %v1309
        %v1326 = vrsqrt.pop %v1310
        %v1327 = vrsqrt.pop %v1311
        %v1328 = vrsqrt.pop %v1312
        %v1329 = vrsqrt.pop %v1313
        %v1330 = vrsqrt.pop %v1314
        %v1331 = vrsqrt.pop %v1315
        %v1332 = vrsqrt.pop %v1316
        %v1333 = vrsqrt.pop %v1317
        %v1334 = vrsqrt.pop %v1318
        %v1335 = vrsqrt.pop %v1319
        %v1336 = vrsqrt.pop %v1320
        %v1337 = vsub.f32 %v1098, %v1193
        %v1338 = vsub.f32 %v1101, %v1194
        %v1339 = vsub.f32 %v1106, %v1195
        %v1340 = vsub.f32 %v1109, %v1196
        %v1341 = vsub.f32 %v1114, %v1197
        %v1342 = vsub.f32 %v1117, %v1198
        %v1343 = vsub.f32 %v1122, %v1199
        %v1344 = vsub.f32 %v1125, %v1200
        %v1345 = vsub.f32 %v1130, %v1201
        %v1346 = vsub.f32 %v1133, %v1202
        %v1347 = vsub.f32 %v1138, %v1203
        %v1348 = vsub.f32 %v1141, %v1204
        %v1349 = vsub.f32 %v1146, %v1205
        %v1350 = vsub.f32 %v1149, %v1206
        %v1351 = vsub.f32 %v1154, %v1207
        %v1352 = vsub.f32 %v1157, %v1208
        %v1353 = vmul.f32 %v1337, %v1321
        %v1354 = vmul.f32 %v1338, %v1322
        %v1355 = vmul.f32 %v1339, %v1323
        %v1356 = vmul.f32 %v1340, %v1324
        %v1357 = vmul.f32 %v1341, %v1325
        %v1358 = vmul.f32 %v1342, %v1326
        %v1359 = vmul.f32 %v1343, %v1327
        %v1360 = vmul.f32 %v1344, %v1328
        %v1361 = vmul.f32 %v1345, %v1329
        %v1362 = vmul.f32 %v1346, %v1330
        %v1363 = vmul.f32 %v1347, %v1331
        %v1364 = vmul.f32 %v1348, %v1332
        %v1365 = vmul.f32 %v1349, %v1333
        %v1366 = vmul.f32 %v1350, %v1334
        %v1367 = vmul.f32 %v1351, %v1335
        %v1368 = vmul.f32 %v1352, %v1336
        %v1369 = vlaneseq
        %v1370 = vshrl.u32 %v1369, 7
        %v1371 = vsub.s32 2, %v1370
        %v1372 = vrot.slane %v360, %v1371
        %v1373 = vmul.f32 %v1353, %v1372
        %v1374 = vmul.f32 %v1354, %v1372
        %v1375 = vmul.f32 %v1355, %v1372
        %v1376 = vmul.f32 %v1356, %v1372
        %v1377 = vmul.f32 %v1357, %v1372
        %v1378 = vmul.f32 %v1358, %v1372
        %v1379 = vmul.f32 %v1359, %v1372
        %v1380 = vmul.f32 %v1360, %v1372
        %v1381 = vmul.f32 %v1361, %v1372
        %v1382 = vmul.f32 %v1362, %v1372
        %v1383 = vmul.f32 %v1363, %v1372
        %v1384 = vmul.f32 %v1364, %v1372
        %v1385 = vmul.f32 %v1365, %v1372
        %v1386 = vmul.f32 %v1366, %v1372
        %v1387 = vmul.f32 %v1367, %v1372
        %v1388 = vmul.f32 %v1368, %v1372
        %v1389 = vlaneseq
        %v1390 = vshrl.u32 %v1389, 7
        %v1391 = vsub.s32 3, %v1390
        %v1392 = vrot.slane %v360, %v1391
        %v1393 = vadd.f32 %v1373, %v1392
        %v1394 = vadd.f32 %v1374, %v1392
        %v1395 = vadd.f32 %v1375, %v1392
        %v1396 = vadd.f32 %v1376, %v1392
        %v1397 = vadd.f32 %v1377, %v1392
        %v1398 = vadd.f32 %v1378, %v1392
        %v1399 = vadd.f32 %v1379, %v1392
        %v1400 = vadd.f32 %v1380, %v1392
        %v1401 = vadd.f32 %v1381, %v1392
        %v1402 = vadd.f32 %v1382, %v1392
        %v1403 = vadd.f32 %v1383, %v1392
        %v1404 = vadd.f32 %v1384, %v1392
        %v1405 = vadd.f32 %v1385, %v1392
        %v1406 = vadd.f32 %v1386, %v1392
        %v1407 = vadd.f32 %v1387, %v1392
        %v1408 = vadd.f32 %v1388, %v1392
        %v1409 = vpack.c.bf16 %v1394, %v1393
        %v1410 = vpack.c.bf16 %v1396, %v1395
        %v1411 = vpack.c.bf16 %v1398, %v1397
        %v1412 = vpack.c.bf16 %v1400, %v1399
        %v1413 = vpack.c.bf16 %v1402, %v1401
        %v1414 = vpack.c.bf16 %v1404, %v1403
        %v1415 = vpack.c.bf16 %v1406, %v1405
        %v1416 = vpack.c.bf16 %v1408, %v1407
        %v1417 = vld [vmem:[#allocation8] sm:$0xf]
        %v1418 = vld [vmem:[#allocation8 + $0x4] sm:$0xf]
        %v1419 = vld [vmem:[#allocation8 + $0x8] sm:$0xf]
        %v1420 = vld [vmem:[#allocation8 + $0xc] sm:$0xf]
        %v1421 = vld [vmem:[#allocation8 + $0x10] sm:$0xf]
        %v1422 = vld [vmem:[#allocation8 + $0x14] sm:$0xf]
        %v1423 = vld [vmem:[#allocation8 + $0x18] sm:$0xf]
        %v1424 = vld [vmem:[#allocation8 + $0x1c] sm:$0xf]
        %v1425 = vld [vmem:[#allocation8 + $0x20] sm:$0xf]
        %v1426 = vld [vmem:[#allocation8 + $0x24] sm:$0xf]
        %v1427 = vld [vmem:[#allocation8 + $0x28] sm:$0xf]
        %v1428 = vld [vmem:[#allocation8 + $0x2c] sm:$0xf]
        %v1429 = vld [vmem:[#allocation8 + $0x30] sm:$0xf]
        %v1430 = vld [vmem:[#allocation8 + $0x34] sm:$0xf]
        %v1431 = vld [vmem:[#allocation8 + $0x38] sm:$0xf]
        %v1432 = vld [vmem:[#allocation8 + $0x3c] sm:$0xf]
        %v1433 = vlaneseq
        %v1434 = vshrl.u32 %v1433, 7
        %v1435 = vsub.s32 4, %v1434
        %v1436 = vrot.slane %v360, %v1435
        %v1453 = vunpack.c.l.b16 %v1417
        %v1454 = vunpack.c.l.b16 %v1418
        %v1455 = vunpack.c.l.b16 %v1419
        %v1456 = vunpack.c.l.b16 %v1420
        %v1457 = vunpack.c.l.b16 %v1421
        %v1458 = vunpack.c.l.b16 %v1422
        %v1459 = vunpack.c.l.b16 %v1423
        %v1460 = vunpack.c.l.b16 %v1424
        %v1461 = vunpack.c.l.b16 %v1425
        %v1462 = vunpack.c.l.b16 %v1426
        %v1463 = vunpack.c.l.b16 %v1427
        %v1464 = vunpack.c.l.b16 %v1428
        %v1465 = vunpack.c.l.b16 %v1429
        %v1466 = vunpack.c.l.b16 %v1430
        %v1467 = vunpack.c.l.b16 %v1431
        %v1468 = vunpack.c.l.b16 %v1432
        %v1469 = vpack.c.b16 %v1454, %v1453
        %v1470 = vpack.c.b16 %v1456, %v1455
        %v1471 = vpack.c.b16 %v1458, %v1457
        %v1472 = vpack.c.b16 %v1460, %v1459
        %v1473 = vpack.c.b16 %v1462, %v1461
        %v1474 = vpack.c.b16 %v1464, %v1463
        %v1475 = vpack.c.b16 %v1466, %v1465
        %v1476 = vpack.c.b16 %v1468, %v1467
        %1485 = vmatprep.subr.bf16.mxu0 0
        %1486 = vmatpush1.bf16.msra.mxu0 %v1476
        %1487 = vmatprep.subr.bf16.mxu0 0
        %1488 = vmatpush1.bf16.msra.mxu0 %v1475
        %1489 = vmatprep.subr.bf16.mxu0 0
        %1490 = vmatpush1.bf16.msra.mxu0 %v1474
        %1491 = vmatprep.subr.bf16.mxu0 0
        %1492 = vmatpush1.bf16.msra.mxu0 %v1473
        %1493 = vmatprep.subr.bf16.mxu0 0
        %1494 = vmatpush1.bf16.msra.mxu0 %v1472
        %1495 = vmatprep.subr.bf16.mxu0 0
        %1496 = vmatpush1.bf16.msra.mxu0 %v1471
        %1497 = vmatprep.subr.bf16.mxu0 0
        %1498 = vmatpush1.bf16.msra.mxu0 %v1470
        %1499 = vmatprep.subr.bf16.mxu0 0
        %1500 = vmatpush1.bf16.msra.mxu0 %v1469
        %1501 = vmatprep.subr.bf16.mxu0 0
        %1502 = vmatpush2.bf16.msra.mxu0 0
        %1503 = vmatprep.subr.bf16.mxu0 0
        %1504 = vmatpush2.bf16.msra.mxu0 0
        %1505 = vmatprep.subr.bf16.mxu0 0
        %1506 = vmatpush2.bf16.msra.mxu0 0
        %1507 = vmatprep.subr.bf16.mxu0 0
        %1508 = vmatpush2.bf16.msra.mxu0 0
        %1509 = vmatprep.subr.bf16.mxu0 0
        %1510 = vmatpush2.bf16.msra.mxu0 0
        %1511 = vmatprep.subr.bf16.mxu0 0
        %1512 = vmatpush2.bf16.msra.mxu0 0
        %1513 = vmatprep.subr.bf16.mxu0 0
        %1514 = vmatpush2.bf16.msra.mxu0 0
        %1515 = vmatprep.subr.bf16.mxu0 0
        %1516 = vmatpush2.bf16.msra.mxu0 0
        %1517 = vmatprep.mubr.bf16.mxu0 0
        %1518 = vmatmul.mubr.bf16.gmra.mxu0 %v1409
        %v1519 = vpop.f32.mrf.mxu0
        %v1520 = vadd.f32 %v1436, %v1519
        %v1521 = vpop.f32.mrf.mxu0
        %v1522 = vpop.f32.mrf.mxu0
        %v1523 = vadd.f32 %v1436, %v1522
        %v1524 = vpop.f32.mrf.mxu0
        %1525 = vmatprep.mubr.bf16.mxu0 0
        %1526 = vmatmul.mubr.bf16.gmra.mxu0 %v1410
        %v1527 = vpop.f32.mrf.mxu0
        %v1528 = vadd.f32 %v1436, %v1527
        %v1529 = vpop.f32.mrf.mxu0
        %v1530 = vpop.f32.mrf.mxu0
        %v1531 = vadd.f32 %v1436, %v1530
        %v1532 = vpop.f32.mrf.mxu0
        %1533 = vmatprep.mubr.bf16.mxu0 0
        %1534 = vmatmul.mubr.bf16.gmra.mxu0 %v1411
        %v1535 = vpop.f32.mrf.mxu0
        %v1536 = vadd.f32 %v1436, %v1535
        %v1537 = vpop.f32.mrf.mxu0
        %v1538 = vpop.f32.mrf.mxu0
        %v1539 = vadd.f32 %v1436, %v1538
        %v1540 = vpop.f32.mrf.mxu0
        %1541 = vmatprep.mubr.bf16.mxu0 0
        %1542 = vmatmul.mubr.bf16.gmra.mxu0 %v1412
        %v1543 = vpop.f32.mrf.mxu0
        %v1544 = vadd.f32 %v1436, %v1543
        %v1545 = vpop.f32.mrf.mxu0
        %v1546 = vpop.f32.mrf.mxu0
        %v1547 = vadd.f32 %v1436, %v1546
        %v1548 = vpop.f32.mrf.mxu0
        %1549 = vmatprep.mubr.bf16.mxu0 0
        %1550 = vmatmul.mubr.bf16.gmra.mxu0 %v1413
        %v1551 = vpop.f32.mrf.mxu0
        %v1552 = vadd.f32 %v1436, %v1551
        %v1553 = vpop.f32.mrf.mxu0
        %v1554 = vpop.f32.mrf.mxu0
        %v1555 = vadd.f32 %v1436, %v1554
        %v1556 = vpop.f32.mrf.mxu0
        %1557 = vmatprep.mubr.bf16.mxu0 0
        %1558 = vmatmul.mubr.bf16.gmra.mxu0 %v1414
        %v1559 = vpop.f32.mrf.mxu0
        %v1560 = vadd.f32 %v1436, %v1559
        %v1561 = vpop.f32.mrf.mxu0
        %v1562 = vpop.f32.mrf.mxu0
        %v1563 = vadd.f32 %v1436, %v1562
        %v1564 = vpop.f32.mrf.mxu0
        %1565 = vmatprep.mubr.bf16.mxu0 0
        %1566 = vmatmul.mubr.bf16.gmra.mxu0 %v1415
        %v1567 = vpop.f32.mrf.mxu0
        %v1568 = vadd.f32 %v1436, %v1567
        %v1569 = vpop.f32.mrf.mxu0
        %v1570 = vpop.f32.mrf.mxu0
        %v1571 = vadd.f32 %v1436, %v1570
        %v1572 = vpop.f32.mrf.mxu0
        %1573 = vmatprep.mubr.bf16.mxu0 0
        %1574 = vmatmul.mubr.bf16.gmra.mxu0 %v1416
        %v1575 = vpop.f32.mrf.mxu0
        %v1576 = vadd.f32 %v1436, %v1575
        %v1577 = vpop.f32.mrf.mxu0
        %v1578 = vpop.f32.mrf.mxu0
        %v1579 = vadd.f32 %v1436, %v1578
        %v1580 = vpop.f32.mrf.mxu0
        %1581 = vdwg.mxu0
        %v1582 = vmul.f32 %v1520, 0.5
        %v1583 = vmul.f32 %v1523, 0.5
        %v1584 = vmul.f32 %v1528, 0.5
        %v1585 = vmul.f32 %v1531, 0.5
        %v1586 = vmul.f32 %v1536, 0.5
        %v1587 = vmul.f32 %v1539, 0.5
        %v1588 = vmul.f32 %v1544, 0.5
        %v1589 = vmul.f32 %v1547, 0.5
        %v1590 = vmul.f32 %v1552, 0.5
        %v1591 = vmul.f32 %v1555, 0.5
        %v1592 = vmul.f32 %v1560, 0.5
        %v1593 = vmul.f32 %v1563, 0.5
        %v1594 = vmul.f32 %v1568, 0.5
        %v1595 = vmul.f32 %v1571, 0.5
        %v1596 = vmul.f32 %v1576, 0.5
        %v1597 = vmul.f32 %v1579, 0.5
        %v1598 = vmul.f32 %v1520, 0.044715
        %v1599 = vmul.f32 %v1523, 0.044715
        %v1600 = vmul.f32 %v1528, 0.044715
        %v1601 = vmul.f32 %v1531, 0.044715
        %v1602 = vmul.f32 %v1536, 0.044715
        %v1603 = vmul.f32 %v1539, 0.044715
        %v1604 = vmul.f32 %v1544, 0.044715
        %v1605 = vmul.f32 %v1547, 0.044715
        %v1606 = vmul.f32 %v1552, 0.044715
        %v1607 = vmul.f32 %v1555, 0.044715
        %v1608 = vmul.f32 %v1560, 0.044715
        %v1609 = vmul.f32 %v1563, 0.044715
        %v1610 = vmul.f32 %v1568, 0.044715
        %v1611 = vmul.f32 %v1571, 0.044715
        %v1612 = vmul.f32 %v1576, 0.044715
        %v1613 = vmul.f32 %v1579, 0.044715
        %v1614 = vmul.f32 %v1598, %v1520
        %v1615 = vmul.f32 %v1599, %v1523
        %v1616 = vmul.f32 %v1600, %v1528
        %v1617 = vmul.f32 %v1601, %v1531
        %v1618 = vmul.f32 %v1602, %v1536
        %v1619 = vmul.f32 %v1603, %v1539
        %v1620 = vmul.f32 %v1604, %v1544
        %v1621 = vmul.f32 %v1605, %v1547
        %v1622 = vmul.f32 %v1606, %v1552
        %v1623 = vmul.f32 %v1607, %v1555
        %v1624 = vmul.f32 %v1608, %v1560
        %v1625 = vmul.f32 %v1609, %v1563
        %v1626 = vmul.f32 %v1610, %v1568
        %v1627 = vmul.f32 %v1611, %v1571
        %v1628 = vmul.f32 %v1612, %v1576
        %v1629 = vmul.f32 %v1613, %v1579
        %v1630 = vmul.f32 %v1614, %v1520
        %v1631 = vmul.f32 %v1615, %v1523
        %v1632 = vmul.f32 %v1616, %v1528
        %v1633 = vmul.f32 %v1617, %v1531
        %v1634 = vmul.f32 %v1618, %v1536
        %v1635 = vmul.f32 %v1619, %v1539
        %v1636 = vmul.f32 %v1620, %v1544
        %v1637 = vmul.f32 %v1621, %v1547
        %v1638 = vmul.f32 %v1622, %v1552
        %v1639 = vmul.f32 %v1623, %v1555
        %v1640 = vmul.f32 %v1624, %v1560
        %v1641 = vmul.f32 %v1625, %v1563
        %v1642 = vmul.f32 %v1626, %v1568
        %v1643 = vmul.f32 %v1627, %v1571
        %v1644 = vmul.f32 %v1628, %v1576
        %v1645 = vmul.f32 %v1629, %v1579
        %v1646 = vadd.f32 %v1520, %v1630
        %v1647 = vadd.f32 %v1523, %v1631
        %v1648 = vadd.f32 %v1528, %v1632
        %v1649 = vadd.f32 %v1531, %v1633
        %v1650 = vadd.f32 %v1536, %v1634
        %v1651 = vadd.f32 %v1539, %v1635
        %v1652 = vadd.f32 %v1544, %v1636
        %v1653 = vadd.f32 %v1547, %v1637
        %v1654 = vadd.f32 %v1552, %v1638
        %v1655 = vadd.f32 %v1555, %v1639
        %v1656 = vadd.f32 %v1560, %v1640
        %v1657 = vadd.f32 %v1563, %v1641
        %v1658 = vadd.f32 %v1568, %v1642
        %v1659 = vadd.f32 %v1571, %v1643
        %v1660 = vadd.f32 %v1576, %v1644
        %v1661 = vadd.f32 %v1579, %v1645
        %v1662 = vmul.f32 %v1646, 0.7978846
        %v1663 = vmul.f32 %v1647, 0.7978846
        %v1664 = vmul.f32 %v1648, 0.7978846
        %v1665 = vmul.f32 %v1649, 0.7978846
        %v1666 = vmul.f32 %v1650, 0.7978846
        %v1667 = vmul.f32 %v1651, 0.7978846
        %v1668 = vmul.f32 %v1652, 0.7978846
        %v1669 = vmul.f32 %v1653, 0.7978846
        %v1670 = vmul.f32 %v1654, 0.7978846
        %v1671 = vmul.f32 %v1655, 0.7978846
        %v1672 = vmul.f32 %v1656, 0.7978846
        %v1673 = vmul.f32 %v1657, 0.7978846
        %v1674 = vmul.f32 %v1658, 0.7978846
        %v1675 = vmul.f32 %v1659, 0.7978846
        %v1676 = vmul.f32 %v1660, 0.7978846
        %v1677 = vmul.f32 %v1661, 0.7978846
        %v1678 = vtanh.pop %v1662
        %v1679 = vtanh.pop %v1663
        %v1680 = vtanh.pop %v1664
        %v1681 = vtanh.pop %v1665
        %v1682 = vtanh.pop %v1666
        %v1683 = vtanh.pop %v1667
        %v1684 = vtanh.pop %v1668
        %v1685 = vtanh.pop %v1669
        %v1686 = vtanh.pop %v1670
        %v1687 = vtanh.pop %v1671
        %v1688 = vtanh.pop %v1672
        %v1689 = vtanh.pop %v1673
        %v1690 = vtanh.pop %v1674
        %v1691 = vtanh.pop %v1675
        %v1692 = vtanh.pop %v1676
        %v1693 = vtanh.pop %v1677
        %v1694 = vadd.f32 %v1678, 1.0
        %v1695 = vadd.f32 %v1679, 1.0
        %v1696 = vadd.f32 %v1680, 1.0
        %v1697 = vadd.f32 %v1681, 1.0
        %v1698 = vadd.f32 %v1682, 1.0
        %v1699 = vadd.f32 %v1683, 1.0
        %v1700 = vadd.f32 %v1684, 1.0
        %v1701 = vadd.f32 %v1685, 1.0
        %v1702 = vadd.f32 %v1686, 1.0
        %v1703 = vadd.f32 %v1687, 1.0
        %v1704 = vadd.f32 %v1688, 1.0
        %v1705 = vadd.f32 %v1689, 1.0
        %v1706 = vadd.f32 %v1690, 1.0
        %v1707 = vadd.f32 %v1691, 1.0
        %v1708 = vadd.f32 %v1692, 1.0
        %v1709 = vadd.f32 %v1693, 1.0
        %v1710 = vmul.f32 %v1582, %v1694
        %v1711 = vmul.f32 %v1583, %v1695
        %v1712 = vmul.f32 %v1584, %v1696
        %v1713 = vmul.f32 %v1585, %v1697
        %v1714 = vmul.f32 %v1586, %v1698
        %v1715 = vmul.f32 %v1587, %v1699
        %v1716 = vmul.f32 %v1588, %v1700
        %v1717 = vmul.f32 %v1589, %v1701
        %v1718 = vmul.f32 %v1590, %v1702
        %v1719 = vmul.f32 %v1591, %v1703
        %v1720 = vmul.f32 %v1592, %v1704
        %v1721 = vmul.f32 %v1593, %v1705
        %v1722 = vmul.f32 %v1594, %v1706
        %v1723 = vmul.f32 %v1595, %v1707
        %v1724 = vmul.f32 %v1596, %v1708
        %v1725 = vmul.f32 %v1597, %v1709
        %v1726 = vpack.c.bf16 %v1711, %v1710
        %v1727 = vpack.c.bf16 %v1713, %v1712
        %v1728 = vpack.c.bf16 %v1715, %v1714
        %v1729 = vpack.c.bf16 %v1717, %v1716
        %v1730 = vpack.c.bf16 %v1719, %v1718
        %v1731 = vpack.c.bf16 %v1721, %v1720
        %v1732 = vpack.c.bf16 %v1723, %v1722
        %v1733 = vpack.c.bf16 %v1725, %v1724
        %v1734 = vld [vmem:[#allocation10] sm:$0xf]
        %v1735 = vld [vmem:[#allocation10 + $0x4] sm:$0xf]
        %v1736 = vld [vmem:[#allocation10 + $0x8] sm:$0xf]
        %v1737 = vld [vmem:[#allocation10 + $0xc] sm:$0xf]
        %v1738 = vld [vmem:[#allocation10 + $0x10] sm:$0xf]
        %v1739 = vld [vmem:[#allocation10 + $0x14] sm:$0xf]
        %v1740 = vld [vmem:[#allocation10 + $0x18] sm:$0xf]
        %v1741 = vld [vmem:[#allocation10 + $0x1c] sm:$0xf]
        %v1742 = vld [vmem:[#allocation10 + $0x20] sm:$0xf]
        %v1743 = vld [vmem:[#allocation10 + $0x24] sm:$0xf]
        %v1744 = vld [vmem:[#allocation10 + $0x28] sm:$0xf]
        %v1745 = vld [vmem:[#allocation10 + $0x2c] sm:$0xf]
        %v1746 = vld [vmem:[#allocation10 + $0x30] sm:$0xf]
        %v1747 = vld [vmem:[#allocation10 + $0x34] sm:$0xf]
        %v1748 = vld [vmem:[#allocation10 + $0x38] sm:$0xf]
        %v1749 = vld [vmem:[#allocation10 + $0x3c] sm:$0xf]
        %v1750 = vlaneseq
        %v1751 = vshrl.u32 %v1750, 7
        %v1752 = vsub.s32 5, %v1751
        %v1753 = vrot.slane %v360, %v1752
        %v1770 = vunpack.c.l.b16 %v1734
        %v1771 = vunpack.c.l.b16 %v1735
        %v1772 = vunpack.c.l.b16 %v1736
        %v1773 = vunpack.c.l.b16 %v1737
        %v1774 = vunpack.c.l.b16 %v1738
        %v1775 = vunpack.c.l.b16 %v1739
        %v1776 = vunpack.c.l.b16 %v1740
        %v1777 = vunpack.c.l.b16 %v1741
        %v1778 = vunpack.c.l.b16 %v1742
        %v1779 = vunpack.c.l.b16 %v1743
        %v1780 = vunpack.c.l.b16 %v1744
        %v1781 = vunpack.c.l.b16 %v1745
        %v1782 = vunpack.c.l.b16 %v1746
        %v1783 = vunpack.c.l.b16 %v1747
        %v1784 = vunpack.c.l.b16 %v1748
        %v1785 = vunpack.c.l.b16 %v1749
        %v1786 = vpack.c.b16 %v1771, %v1770
        %v1787 = vpack.c.b16 %v1773, %v1772
        %v1788 = vpack.c.b16 %v1775, %v1774
        %v1789 = vpack.c.b16 %v1777, %v1776
        %v1790 = vpack.c.b16 %v1779, %v1778
        %v1791 = vpack.c.b16 %v1781, %v1780
        %v1792 = vpack.c.b16 %v1783, %v1782
        %v1793 = vpack.c.b16 %v1785, %v1784
        %1802 = vmatprep.subr.bf16.mxu0 0
        %1803 = vmatpush1.bf16.msra.mxu0 %v1793
        %1804 = vmatprep.subr.bf16.mxu0 0
        %1805 = vmatpush1.bf16.msra.mxu0 %v1792
        %1806 = vmatprep.subr.bf16.mxu0 0
        %1807 = vmatpush1.bf16.msra.mxu0 %v1791
        %1808 = vmatprep.subr.bf16.mxu0 0
        %1809 = vmatpush1.bf16.msra.mxu0 %v1790
        %1810 = vmatprep.subr.bf16.mxu0 0
        %1811 = vmatpush1.bf16.msra.mxu0 %v1789
        %1812 = vmatprep.subr.bf16.mxu0 0
        %1813 = vmatpush1.bf16.msra.mxu0 %v1788
        %1814 = vmatprep.subr.bf16.mxu0 0
        %1815 = vmatpush1.bf16.msra.mxu0 %v1787
        %1816 = vmatprep.subr.bf16.mxu0 0
        %1817 = vmatpush1.bf16.msra.mxu0 %v1786
        %1818 = vmatprep.subr.bf16.mxu0 0
        %1819 = vmatpush2.bf16.msra.mxu0 0
        %1820 = vmatprep.subr.bf16.mxu0 0
        %1821 = vmatpush2.bf16.msra.mxu0 0
        %1822 = vmatprep.subr.bf16.mxu0 0
        %1823 = vmatpush2.bf16.msra.mxu0 0
        %1824 = vmatprep.subr.bf16.mxu0 0
        %1825 = vmatpush2.bf16.msra.mxu0 0
        %1826 = vmatprep.subr.bf16.mxu0 0
        %1827 = vmatpush2.bf16.msra.mxu0 0
        %1828 = vmatprep.subr.bf16.mxu0 0
        %1829 = vmatpush2.bf16.msra.mxu0 0
        %1830 = vmatprep.subr.bf16.mxu0 0
        %1831 = vmatpush2.bf16.msra.mxu0 0
        %1832 = vmatprep.subr.bf16.mxu0 0
        %1833 = vmatpush2.bf16.msra.mxu0 0
        %1834 = vmatprep.mubr.bf16.mxu0 0
        %1835 = vmatmul.mubr.bf16.gmra.mxu0 %v1726
        %v1836 = vpop.f32.mrf.mxu0
        %v1837 = vadd.f32 %v1753, %v1836
        %v1838 = vpop.f32.mrf.mxu0
        %v1839 = vpop.f32.mrf.mxu0
        %v1840 = vadd.f32 %v1753, %v1839
        %v1841 = vpop.f32.mrf.mxu0
        %1842 = vmatprep.mubr.bf16.mxu0 0
        %1843 = vmatmul.mubr.bf16.gmra.mxu0 %v1727
        %v1844 = vpop.f32.mrf.mxu0
        %v1845 = vadd.f32 %v1753, %v1844
        %v1846 = vpop.f32.mrf.mxu0
        %v1847 = vpop.f32.mrf.mxu0
        %v1848 = vadd.f32 %v1753, %v1847
        %v1849 = vpop.f32.mrf.mxu0
        %1850 = vmatprep.mubr.bf16.mxu0 0
        %1851 = vmatmul.mubr.bf16.gmra.mxu0 %v1728
        %v1852 = vpop.f32.mrf.mxu0
        %v1853 = vadd.f32 %v1753, %v1852
        %v1854 = vpop.f32.mrf.mxu0
        %v1855 = vpop.f32.mrf.mxu0
        %v1856 = vadd.f32 %v1753, %v1855
        %v1857 = vpop.f32.mrf.mxu0
        %1858 = vmatprep.mubr.bf16.mxu0 0
        %1859 = vmatmul.mubr.bf16.gmra.mxu0 %v1729
        %v1860 = vpop.f32.mrf.mxu0
        %v1861 = vadd.f32 %v1753, %v1860
        %v1862 = vpop.f32.mrf.mxu0
        %v1863 = vpop.f32.mrf.mxu0
        %v1864 = vadd.f32 %v1753, %v1863
        %v1865 = vpop.f32.mrf.mxu0
        %1866 = vmatprep.mubr.bf16.mxu0 0
        %1867 = vmatmul.mubr.bf16.gmra.mxu0 %v1730
        %v1868 = vpop.f32.mrf.mxu0
        %v1869 = vadd.f32 %v1753, %v1868
        %v1870 = vpop.f32.mrf.mxu0
        %v1871 = vpop.f32.mrf.mxu0
        %v1872 = vadd.f32 %v1753, %v1871
        %v1873 = vpop.f32.mrf.mxu0
        %1874 = vmatprep.mubr.bf16.mxu0 0
        %1875 = vmatmul.mubr.bf16.gmra.mxu0 %v1731
        %v1876 = vpop.f32.mrf.mxu0
        %v1877 = vadd.f32 %v1753, %v1876
        %v1878 = vpop.f32.mrf.mxu0
        %v1879 = vpop.f32.mrf.mxu0
        %v1880 = vadd.f32 %v1753, %v1879
        %v1881 = vpop.f32.mrf.mxu0
        %1882 = vmatprep.mubr.bf16.mxu0 0
        %1883 = vmatmul.mubr.bf16.gmra.mxu0 %v1732
        %v1884 = vpop.f32.mrf.mxu0
        %v1885 = vadd.f32 %v1753, %v1884
        %v1886 = vpop.f32.mrf.mxu0
        %v1887 = vpop.f32.mrf.mxu0
        %v1888 = vadd.f32 %v1753, %v1887
        %v1889 = vpop.f32.mrf.mxu0
        %1890 = vmatprep.mubr.bf16.mxu0 0
        %1891 = vmatmul.mubr.bf16.gmra.mxu0 %v1733
        %v1892 = vpop.f32.mrf.mxu0
        %v1893 = vadd.f32 %v1753, %v1892
        %v1894 = vpop.f32.mrf.mxu0
        %v1895 = vpop.f32.mrf.mxu0
        %v1896 = vadd.f32 %v1753, %v1895
        %v1897 = vpop.f32.mrf.mxu0
        %1898 = vdwg.mxu0
        %v1899 = vadd.f32 %v1393, %v1837
        %v1900 = vadd.f32 %v1394, %v1840
        %v1901 = vadd.f32 %v1395, %v1845
        %v1902 = vadd.f32 %v1396, %v1848
        %v1903 = vadd.f32 %v1397, %v1853
        %v1904 = vadd.f32 %v1398, %v1856
        %v1905 = vadd.f32 %v1399, %v1861
        %v1906 = vadd.f32 %v1400, %v1864
        %v1907 = vadd.f32 %v1401, %v1869
        %v1908 = vadd.f32 %v1402, %v1872
        %v1909 = vadd.f32 %v1403, %v1877
        %v1910 = vadd.f32 %v1404, %v1880
        %v1911 = vadd.f32 %v1405, %v1885
        %v1912 = vadd.f32 %v1406, %v1888
        %v1913 = vadd.f32 %v1407, %v1893
        %v1914 = vadd.f32 %v1408, %v1896
        %1915 = vst [vmem:[%s340] sm:$0xff] %v1899
        %1916 = vst [vmem:[%s340 + $0x8] sm:$0xff] %v1900
        %1917 = vst [vmem:[%s340 + $0x10] sm:$0xff] %v1901
        %1918 = vst [vmem:[%s340 + $0x18] sm:$0xff] %v1902
        %1919 = vst [vmem:[%s340 + $0x20] sm:$0xff] %v1903
        %1920 = vst [vmem:[%s340 + $0x28] sm:$0xff] %v1904
        %1921 = vst [vmem:[%s340 + $0x30] sm:$0xff] %v1905
        %1922 = vst [vmem:[%s340 + $0x38] sm:$0xff] %v1906
        %1923 = vst [vmem:[%s340 + $0x40] sm:$0xff] %v1907
        %1924 = vst [vmem:[%s340 + $0x48] sm:$0xff] %v1908
        %1925 = vst [vmem:[%s340 + $0x50] sm:$0xff] %v1909
        %1926 = vst [vmem:[%s340 + $0x58] sm:$0xff] %v1910
        %1927 = vst [vmem:[%s340 + $0x60] sm:$0xff] %v1911
        %1928 = vst [vmem:[%s340 + $0x68] sm:$0xff] %v1912
        %1929 = vst [vmem:[%s340 + $0x70] sm:$0xff] %v1913
        %1930 = vst [vmem:[%s340 + $0x78] sm:$0xff] %v1914
        %s1931 = sand.u32 %s165, 1
        %s1932 = scalar_lea.sflag [#allocation4], %s1931
        %s1933 = sand.u32 %s165, 1
        %s1934 = smul.addr %s1933, 128
        %s1935 = scalar_lea.vmem [#allocation13], %s1934
        // Predicated region
        $region69: #{tpu_custom_call.1} parent=43 // pred_check
          %p1936 = pneg %p175
        $region70: #{tpu_custom_call.1} parent=43 // pred_check_branch
          %1938 = sbr.rel (%p1936) target = $region72
        $region71: #{tpu_custom_call.1} parent=43 // pred_region
          %s1939 = smul.u32 16, %s26
          %s1941 = ssub.s32 2048, 2048
          %1942 = vsyncadd %s1932, %s1941
          %s1943 = smul.addr %s1939, 128
          %s1944 = scalar_lea.hbm %s6, %s1943
          %s1945 = sshll.u32 %s1935, 4
          %s1946 = int_to_ptr.vmem [resolvable:$true] %s1945
          %1951 = dma.vmem_to_hbm [thread:$0]  %s1946, 2048, %s1944, %s1932, 128, 128, 8
        $region72: #{tpu_custom_call.1} parent=43 // pred_fallthru
          _
      $region44: #{tpu_custom_call.1} parent=5 // pred_fallthru
        _
      %p1952 = scmp.le.s32.totalorder 2, %s21
      // Predicated region
      $region73: #{tpu_custom_call.1} parent=5 // pred_check
        %p1953 = pneg %p1952
      $region74: #{tpu_custom_call.1} parent=5 // pred_check_branch
        %1955 = sbr.rel (%p1953) target = $region76
      $region75: #{tpu_custom_call.1} parent=5 // pred_region
        %s1956 = ssub.s32 %s21, 2
        // Predicated region
        $region77: #{tpu_custom_call.1} parent=75 // pred_check
          %p1957 = pneg %p181
        $region78: #{tpu_custom_call.1} parent=75 // pred_check_branch
          %1959 = sbr.rel (%p1957) target = $region80
        $region79: #{tpu_custom_call.1} parent=75 // pred_region
          %s1960 = sand.u32 %s166, 1
          %s1961 = scalar_lea.sflag [#allocation4], %s1960
          %s1962 = sand.u32 %s166, 1
          %s1963 = smul.addr %s1962, 128
          %s1964 = scalar_lea.vmem [#allocation13], %s1963
          %1965 = dma.done %s1961, 2048
        $region80: #{tpu_custom_call.1} parent=75 // pred_fallthru
          _
      $region76: #{tpu_custom_call.1} parent=5 // pred_fallthru
        _
    $region6: #{tpu_custom_call.1} parent=1 // loop_footer
      %s25 = sadd.s32 1, %s21
    $region7: #{tpu_custom_call.1} parent=1 // loop_footer_branch
      %20 = sbr.rel target = $region3
    $region8: #{tpu_custom_call.1} parent=1 // loop_exit
      _
    %1966 = vsyncpa [#allocation3], 1
    %s1967 = scalar_lea.sflag [#allocation3], 1
    %1968 = vsyncpa %s1967, 1
    %1969 = vsyncpa [#allocation6], 1
    %1970 = vsyncpa [#allocation9], 1
    %1971 = vsyncpa [#allocation12], 1
    %1972 = vsyncpa [#allocation4], 1
    %s1973 = scalar_lea.sflag [#allocation4], 1
    %1974 = vsyncpa %s1973, 1

</llo_original>
